<compile_context>
chip_gen: v5e
topology: v5e:2x2
jax: 0.10.0
libtpu: 0.0.40
codegen_flags: <defaults>
</compile_context>

<pallas_src>
import jax
import jax.numpy as jnp
import numpy as np
from jax.experimental import pallas as pl
from jax.experimental.pallas import tpu as pltpu

F_IN = 94    # hard-coded in the PyTorch module (nn.Linear(94, ...))
F_PAD = 128  # lane-aligned contraction dim for the first-layer matmuls


def _round_up(x, m):
    return (x + m - 1) // m * m


def vae_kernel(beta_ref, factor_ref, eps_ref,
               w1_ref, b1_ref, wh_ref, bh_ref,
               wf1_ref, bf1_ref, wf2_ref, bf2_ref,
               out_ref, mu_ref, logvar_ref, beta_out_ref):
    H = mu_ref.shape[1]

    beta = beta_ref[...]      # (TM, 128)   zero-padded cols 94:128
    factor = factor_ref[...]  # (TM, 128)

    # beta path: Linear(128->64) + ReLU   (Dropout == identity in eval mode)
    h1 = jnp.dot(beta, w1_ref[...], preferred_element_type=jnp.float32) + b1_ref[...]
    h1 = jnp.maximum(h1, 0.0)

    # fused + folded heads: one dot -> [mu | logvar]  (TM, 2H)
    heads = jnp.dot(h1, wh_ref[...], preferred_element_type=jnp.float32) + bh_ref[...]
    mu = heads[:, :H]
    logvar = heads[:, H:]

    # reparameterization: mu + eps * exp(0.5 * logvar)
    beta_out = mu + eps_ref[...] * jnp.exp(0.5 * logvar)

    # factor path: Linear(128->32) -> ReLU -> Linear(32->H)
    f1 = jnp.dot(factor, wf1_ref[...], preferred_element_type=jnp.float32) + bf1_ref[...]
    f1 = jnp.maximum(f1, 0.0)
    factor_out = jnp.dot(f1, wf2_ref[...], preferred_element_type=jnp.float32) + bf2_ref[...]

    # output = sum over feature axis (dim=1 in torch)
    out_ref[...] = jnp.sum(beta_out * factor_out, axis=1, keepdims=True)
    mu_ref[...] = mu
    logvar_ref[...] = logvar
    beta_out_ref[...] = beta_out


def _fold_params(p):
    """Host-side precompute: fold w2/b2 into mu/logvar heads, fuse the two
    heads into one (64, 2H) weight, and pad the K=94 contraction dim to 128."""
    wmu_f = p["w2"] @ p["wmu"]                 # (64, H)
    wlv_f = p["w2"] @ p["wlv"]                 # (64, H)
    bmu_f = p["b2"] @ p["wmu"] + p["bmu"]      # (1, H)
    blv_f = p["b2"] @ p["wlv"] + p["blv"]      # (1, H)
    w_head = jnp.concatenate([wmu_f, wlv_f], axis=1)   # (64, 2H)
    b_head = jnp.concatenate([bmu_f, blv_f], axis=1)   # (1, 2H)
    w1p = jnp.pad(p["w1"], ((0, F_PAD - F_IN), (0, 0)))    # zero rows -> exact
    wf1p = jnp.pad(p["wf1"], ((0, F_PAD - F_IN), (0, 0)))
    return w1p, p["b1"], w_head, b_head, wf1p, p["bf1"], p["wf2"], p["bf2"]


def vae_forward(beta_input, factor_input, eps, params, tm=128):
    N = beta_input.shape[0]
    H = params["wmu"].shape[1]

    w1p, b1, w_head, b_head, wf1p, bf1, wf2, bf2 = _fold_params(params)

    # Row-tile size: multiple of 8 sublanes; do not over-pad tiny batches.
    tm = min(tm, _round_up(N, 8))
    n_pad = _round_up(N, tm)
    grid = (n_pad // tm,)

    # Pad rows to a tile multiple and the feature dim 94 -> 128 (zeros).
    beta_p = jnp.pad(beta_input.astype(jnp.float32),
                     ((0, n_pad - N), (0, F_PAD - F_IN)))
    factor_p = jnp.pad(factor_input.astype(jnp.float32),
                       ((0, n_pad - N), (0, F_PAD - F_IN)))
    eps_p = jnp.pad(eps.astype(jnp.float32), ((0, n_pad - N), (0, 0)))

    def row_spec(cols):
        return pl.BlockSpec((tm, cols), lambda i: (i, 0))

    def full_spec(arr):
        return pl.BlockSpec(arr.shape, lambda i: (0, 0))

    in_specs = [
        row_spec(F_PAD),          # beta
        row_spec(F_PAD),          # factor
        row_spec(H),              # eps
        full_spec(w1p),  full_spec(b1),
        full_spec(w_head), full_spec(b_head),
        full_spec(wf1p), full_spec(bf1),
        full_spec(wf2),  full_spec(bf2),
    ]
    out_specs = [
        pl.BlockSpec((tm, 1), lambda i: (i, 0)),   # output (per-row scalar)
        row_spec(H),                               # mu
        row_spec(H),                               # logvar
        row_spec(H),                               # beta_out
    ]
    out_shapes = (
        jax.ShapeDtypeStruct((n_pad, 1), jnp.float32),
        jax.ShapeDtypeStruct((n_pad, H), jnp.float32),
        jax.ShapeDtypeStruct((n_pad, H), jnp.float32),
        jax.ShapeDtypeStruct((n_pad, H), jnp.float32),
    )

    out, mu, logvar, beta_out = pl.pallas_call(
        vae_kernel,
        out_shape=out_shapes,
        grid_spec=pltpu.PrefetchScalarGridSpec(
            num_scalar_prefetch=0,
            grid=grid,
            in_specs=in_specs,
            out_specs=out_specs,
        ),
        compiler_params=pltpu.CompilerParams(
            dimension_semantics=("parallel",),          # shard rows across TCs (v7x)
            vmem_limit_bytes=32 * 1024 * 1024,          # tiles use <1 MiB; safe on v5e/v6e/v7x
        ),
    )(beta_p, factor_p, eps_p, w1p, b1, w_head, b_head, wf1p, bf1, wf2, bf2)

    return out[:N, 0], mu[:N], logvar[:N], beta_out[:N]


def init_params(key, hidden_size=16, hidden_dims=(64, 32, 16)):
    ks = jax.random.split(key, 12)
    h0, h1 = hidden_dims[0], hidden_dims[1]
    H = hidden_size

    def lin(kw, kb, fan_in, fan_out):
        lim = 1.0 / np.sqrt(fan_in)
        w = jax.random.uniform(kw, (fan_in, fan_out), jnp.float32, -lim, lim)
        b = jax.random.uniform(kb, (1, fan_out), jnp.float32, -lim, lim)
        return w, b

    p = {}
    p["w1"], p["b1"] = lin(ks[0], ks[1], F_IN, h0)     # beta_encoder[0]
    p["w2"], p["b2"] = lin(ks[2], ks[3], h0, H)        # beta_encoder[3]
    p["wmu"], p["bmu"] = lin(ks[4], ks[5], H, H)       # mu head
    p["wlv"], p["blv"] = lin(ks[6], ks[7], H, H)       # logvar head
    p["wf1"], p["bf1"] = lin(ks[8], ks[9], F_IN, h1)   # ca_factor[0]
    p["wf2"], p["bf2"] = lin(ks[10], ks[11], h1, H)    # ca_factor[2]
    return p


def reference_forward(beta, factor, eps, p):
    """Pure-JAX reference following the original (unfolded) module math."""
    h1 = jnp.maximum(beta @ p["w1"] + p["b1"], 0.0)
    lat = h1 @ p["w2"] + p["b2"]
    mu = lat @ p["wmu"] + p["bmu"]
    logvar = lat @ p["wlv"] + p["blv"]
    beta_out = mu + eps * jnp.exp(0.5 * logvar)
    f1 = jnp.maximum(factor @ p["wf1"] + p["bf1"], 0.0)
    fo = f1 @ p["wf2"] + p["bf2"]
    return jnp.sum(beta_out * fo, axis=1), mu, logvar, beta_out


if __name__ == "__main__":
    key = jax.random.PRNGKey(0)
    k_params, k_beta, k_factor, k_eps = jax.random.split(key, 4)

    N = 200            # number of portfolios / rows (exercises row padding + 2-step grid)
    hidden_size = 16   # latent size

    params = init_params(k_params, hidden_size=hidden_size)
    beta_input = jax.random.normal(k_beta, (N, F_IN), jnp.float32)
    factor_input = jax.random.normal(k_factor, (N, F_IN), jnp.float32)
    # eps ~ N(0,1) for the reparameterization trick (deterministic host-side glue).
    eps = jax.random.normal(k_eps, (N, hidden_size), jnp.float32)

    out, mu, logvar, beta_out = vae_forward(beta_input, factor_input, eps, params)
    jax.block_until_ready((out, mu, logvar, beta_out))

    r_out, r_mu, r_lv, r_bo = reference_forward(beta_input, factor_input, eps, params)
    # Slightly looser tolerance: the host-side w2 fold changes f32 rounding order.
    np.testing.assert_allclose(np.asarray(out), np.asarray(r_out), rtol=1e-4, atol=1e-4)
    np.testing.assert_allclose(np.asarray(mu), np.asarray(r_mu), rtol=1e-4, atol=1e-4)
    np.testing.assert_allclose(np.asarray(logvar), np.asarray(r_lv), rtol=1e-4, atol=1e-4)
    np.testing.assert_allclose(np.asarray(beta_out), np.asarray(r_bo), rtol=1e-4, atol=1e-4)

    print("KERNEL_OK")
</pallas_src>

<mosaic_0001>
module attributes {stable_mosaic.version = 11 : i64} {
  func.func @vae_kernel(%arg0: i32, %arg1: memref<128x128xf32, #tpu.memory_space<vmem>>, %arg2: memref<128x128xf32, #tpu.memory_space<vmem>>, %arg3: memref<128x16xf32, #tpu.memory_space<vmem>>, %arg4: memref<128x64xf32, #tpu.memory_space<vmem>>, %arg5: memref<1x64xf32, #tpu.memory_space<vmem>>, %arg6: memref<64x32xf32, #tpu.memory_space<vmem>>, %arg7: memref<1x32xf32, #tpu.memory_space<vmem>>, %arg8: memref<128x32xf32, #tpu.memory_space<vmem>>, %arg9: memref<1x32xf32, #tpu.memory_space<vmem>>, %arg10: memref<32x16xf32, #tpu.memory_space<vmem>>, %arg11: memref<1x16xf32, #tpu.memory_space<vmem>>, %arg12: memref<128x1xf32, #tpu.memory_space<vmem>>, %arg13: memref<128x16xf32, #tpu.memory_space<vmem>>, %arg14: memref<128x16xf32, #tpu.memory_space<vmem>>, %arg15: memref<128x16xf32, #tpu.memory_space<vmem>>) attributes {dimension_semantics = [#tpu.dimension_semantics<parallel>], iteration_bounds = array<i64: 2>, scalar_prefetch = 0 : i64, scratch_operands = 0 : i64, tpu.core_type = #tpu.core_type<tc>, window_params = [{transform_indices = @transform_0, window_bounds = array<i64: 128, 128>}, {transform_indices = @transform_1, window_bounds = array<i64: 128, 128>}, {transform_indices = @transform_2, window_bounds = array<i64: 128, 16>}, {pipeline_mode = #tpu.pipeline_mode<synchronous>, transform_indices = @transform_3, window_bounds = array<i64: 128, 64>}, {pipeline_mode = #tpu.pipeline_mode<synchronous>, transform_indices = @transform_4, window_bounds = array<i64: 1, 64>}, {pipeline_mode = #tpu.pipeline_mode<synchronous>, transform_indices = @transform_5, window_bounds = array<i64: 64, 32>}, {pipeline_mode = #tpu.pipeline_mode<synchronous>, transform_indices = @transform_6, window_bounds = array<i64: 1, 32>}, {pipeline_mode = #tpu.pipeline_mode<synchronous>, transform_indices = @transform_7, window_bounds = array<i64: 128, 32>}, {pipeline_mode = #tpu.pipeline_mode<synchronous>, transform_indices = @transform_8, window_bounds = array<i64: 1, 32>}, {pipeline_mode = #tpu.pipeline_mode<synchronous>, transform_indices = @transform_9, window_bounds = array<i64: 32, 16>}, {pipeline_mode = #tpu.pipeline_mode<synchronous>, transform_indices = @transform_10, window_bounds = array<i64: 1, 16>}, {transform_indices = @transform_11, window_bounds = array<i64: 128, 1>}, {transform_indices = @transform_12, window_bounds = array<i64: 128, 16>}, {transform_indices = @transform_13, window_bounds = array<i64: 128, 16>}, {transform_indices = @transform_14, window_bounds = array<i64: 128, 16>}]} {
    %c0 = arith.constant 0 : index
    %c0_0 = arith.constant 0 : index
    %0 = vector.load %arg1[%c0, %c0_0] : memref<128x128xf32, #tpu.memory_space<vmem>>, vector<128x128xf32>
    %c0_1 = arith.constant 0 : index
    %c0_2 = arith.constant 0 : index
    %1 = vector.load %arg2[%c0_1, %c0_2] : memref<128x128xf32, #tpu.memory_space<vmem>>, vector<128x128xf32>
    %c0_3 = arith.constant 0 : index
    %c0_4 = arith.constant 0 : index
    %2 = vector.load %arg4[%c0_3, %c0_4] : memref<128x64xf32, #tpu.memory_space<vmem>>, vector<128x64xf32>
    %cst = arith.constant dense<0.000000e+00> : vector<128x64xf32>
    %3 = tpu.matmul %0, %2, %cst {dimension_numbers = #tpu.dot_dimension_numbers<[1], [0], [0], [1], [0, 0, 1, 1], [], []>} : vector<128x128xf32>, vector<128x64xf32>, vector<128x64xf32> -> vector<128x64xf32>
    %c0_5 = arith.constant 0 : index
    %c0_6 = arith.constant 0 : index
    %4 = vector.load %arg5[%c0_5, %c0_6] : memref<1x64xf32, #tpu.memory_space<vmem>>, vector<1x64xf32>
    %5 = vector.broadcast %4 : vector<1x64xf32> to vector<128x64xf32>
    %6 = arith.addf %3, %5 : vector<128x64xf32>
    %cst_7 = arith.constant 0.000000e+00 : f32
    %7 = vector.broadcast %cst_7 : f32 to vector<128x64xf32>
    %8 = arith.maximumf %6, %7 : vector<128x64xf32>
    %c0_8 = arith.constant 0 : index
    %c0_9 = arith.constant 0 : index
    %9 = vector.load %arg6[%c0_8, %c0_9] : memref<64x32xf32, #tpu.memory_space<vmem>>, vector<64x32xf32>
    %cst_10 = arith.constant dense<0.000000e+00> : vector<128x32xf32>
    %10 = tpu.matmul %8, %9, %cst_10 {dimension_numbers = #tpu.dot_dimension_numbers<[1], [0], [0], [1], [0, 0, 1, 1], [], []>} : vector<128x64xf32>, vector<64x32xf32>, vector<128x32xf32> -> vector<128x32xf32>
    %c0_11 = arith.constant 0 : index
    %c0_12 = arith.constant 0 : index
    %11 = vector.load %arg7[%c0_11, %c0_12] : memref<1x32xf32, #tpu.memory_space<vmem>>, vector<1x32xf32>
    %12 = vector.broadcast %11 : vector<1x32xf32> to vector<128x32xf32>
    %13 = arith.addf %10, %12 : vector<128x32xf32>
    %14 = vector.extract_strided_slice %13 {offsets = [0, 0], sizes = [128, 16], strides = [1, 1]} : vector<128x32xf32> to vector<128x16xf32>
    %15 = vector.extract_strided_slice %13 {offsets = [0, 16], sizes = [128, 16], strides = [1, 1]} : vector<128x32xf32> to vector<128x16xf32>
    %c0_13 = arith.constant 0 : index
    %c0_14 = arith.constant 0 : index
    %16 = vector.load %arg3[%c0_13, %c0_14] : memref<128x16xf32, #tpu.memory_space<vmem>>, vector<128x16xf32>
    %cst_15 = arith.constant 5.000000e-01 : f32
    %17 = vector.broadcast %cst_15 : f32 to vector<128x16xf32>
    %18 = arith.mulf %17, %15 : vector<128x16xf32>
    %19 = math.exp %18 : vector<128x16xf32>
    %20 = arith.mulf %16, %19 : vector<128x16xf32>
    %21 = arith.addf %14, %20 : vector<128x16xf32>
    %c0_16 = arith.constant 0 : index
    %c0_17 = arith.constant 0 : index
    %22 = vector.load %arg8[%c0_16, %c0_17] : memref<128x32xf32, #tpu.memory_space<vmem>>, vector<128x32xf32>
    %cst_18 = arith.constant dense<0.000000e+00> : vector<128x32xf32>
    %23 = tpu.matmul %1, %22, %cst_18 {dimension_numbers = #tpu.dot_dimension_numbers<[1], [0], [0], [1], [0, 0, 1, 1], [], []>} : vector<128x128xf32>, vector<128x32xf32>, vector<128x32xf32> -> vector<128x32xf32>
    %c0_19 = arith.constant 0 : index
    %c0_20 = arith.constant 0 : index
    %24 = vector.load %arg9[%c0_19, %c0_20] : memref<1x32xf32, #tpu.memory_space<vmem>>, vector<1x32xf32>
    %25 = vector.broadcast %24 : vector<1x32xf32> to vector<128x32xf32>
    %26 = arith.addf %23, %25 : vector<128x32xf32>
    %cst_21 = arith.constant 0.000000e+00 : f32
    %27 = vector.broadcast %cst_21 : f32 to vector<128x32xf32>
    %28 = arith.maximumf %26, %27 : vector<128x32xf32>
    %c0_22 = arith.constant 0 : index
    %c0_23 = arith.constant 0 : index
    %29 = vector.load %arg10[%c0_22, %c0_23] : memref<32x16xf32, #tpu.memory_space<vmem>>, vector<32x16xf32>
    %cst_24 = arith.constant dense<0.000000e+00> : vector<128x16xf32>
    %30 = tpu.matmul %28, %29, %cst_24 {dimension_numbers = #tpu.dot_dimension_numbers<[1], [0], [0], [1], [0, 0, 1, 1], [], []>} : vector<128x32xf32>, vector<32x16xf32>, vector<128x16xf32> -> vector<128x16xf32>
    %c0_25 = arith.constant 0 : index
    %c0_26 = arith.constant 0 : index
    %31 = vector.load %arg11[%c0_25, %c0_26] : memref<1x16xf32, #tpu.memory_space<vmem>>, vector<1x16xf32>
    %32 = vector.broadcast %31 : vector<1x16xf32> to vector<128x16xf32>
    %33 = arith.addf %30, %32 : vector<128x16xf32>
    %34 = arith.mulf %21, %33 : vector<128x16xf32>
    %cst_27 = arith.constant dense<0.000000e+00> : vector<128xf32>
    %35 = vector.multi_reduction <add>, %34, %cst_27 [1] : vector<128x16xf32> to vector<128xf32>
    %36 = vector.shape_cast %35 : vector<128xf32> to vector<128x1xf32>
    %c0_28 = arith.constant 0 : index
    %c0_29 = arith.constant 0 : index
    %37 = vector.load %arg12[%c0_28, %c0_29] : memref<128x1xf32, #tpu.memory_space<vmem>>, vector<128x1xf32>
    tpu.vector_store %arg12[%c0_28, %c0_29], %36 {strides = array<i32>} : memref<128x1xf32, #tpu.memory_space<vmem>>, vector<128x1xf32>,
    %c0_30 = arith.constant 0 : index
    %c0_31 = arith.constant 0 : index
    %38 = vector.load %arg13[%c0_30, %c0_31] : memref<128x16xf32, #tpu.memory_space<vmem>>, vector<128x16xf32>
    tpu.vector_store %arg13[%c0_30, %c0_31], %14 {strides = array<i32>} : memref<128x16xf32, #tpu.memory_space<vmem>>, vector<128x16xf32>,
    %c0_32 = arith.constant 0 : index
    %c0_33 = arith.constant 0 : index
    %39 = vector.load %arg14[%c0_32, %c0_33] : memref<128x16xf32, #tpu.memory_space<vmem>>, vector<128x16xf32>
    tpu.vector_store %arg14[%c0_32, %c0_33], %15 {strides = array<i32>} : memref<128x16xf32, #tpu.memory_space<vmem>>, vector<128x16xf32>,
    %c0_34 = arith.constant 0 : index
    %c0_35 = arith.constant 0 : index
    %40 = vector.load %arg15[%c0_34, %c0_35] : memref<128x16xf32, #tpu.memory_space<vmem>>, vector<128x16xf32>
    tpu.vector_store %arg15[%c0_34, %c0_35], %21 {strides = array<i32>} : memref<128x16xf32, #tpu.memory_space<vmem>>, vector<128x16xf32>,
    return
  }
  func.func @transform_0(%arg0: i32) -> (i32, i32) {
    %c0_i32 = arith.constant 0 : i32
    %c0_i32_0 = arith.constant 0 : i32
    return %arg0, %c0_i32 : i32, i32
  }
  func.func @transform_1(%arg0: i32) -> (i32, i32) {
    %c0_i32 = arith.constant 0 : i32
    %c0_i32_0 = arith.constant 0 : i32
    return %arg0, %c0_i32 : i32, i32
  }
  func.func @transform_2(%arg0: i32) -> (i32, i32) {
    %c0_i32 = arith.constant 0 : i32
    %c0_i32_0 = arith.constant 0 : i32
    return %arg0, %c0_i32 : i32, i32
  }
  func.func @transform_3(%arg0: i32) -> (i32, i32) {
    %c0_i32 = arith.constant 0 : i32
    %c0_i32_0 = arith.constant 0 : i32
    %c0_i32_1 = arith.constant 0 : i32
    return %c0_i32, %c0_i32_0 : i32, i32
  }
  func.func @transform_4(%arg0: i32) -> (i32, i32) {
    %c0_i32 = arith.constant 0 : i32
    %c0_i32_0 = arith.constant 0 : i32
    %c0_i32_1 = arith.constant 0 : i32
    return %c0_i32, %c0_i32_0 : i32, i32
  }
  func.func @transform_5(%arg0: i32) -> (i32, i32) {
    %c0_i32 = arith.constant 0 : i32
    %c0_i32_0 = arith.constant 0 : i32
    %c0_i32_1 = arith.constant 0 : i32
    return %c0_i32, %c0_i32_0 : i32, i32
  }
  func.func @transform_6(%arg0: i32) -> (i32, i32) {
    %c0_i32 = arith.constant 0 : i32
    %c0_i32_0 = arith.constant 0 : i32
    %c0_i32_1 = arith.constant 0 : i32
    return %c0_i32, %c0_i32_0 : i32, i32
  }
  func.func @transform_7(%arg0: i32) -> (i32, i32) {
    %c0_i32 = arith.constant 0 : i32
    %c0_i32_0 = arith.constant 0 : i32
    %c0_i32_1 = arith.constant 0 : i32
    return %c0_i32, %c0_i32_0 : i32, i32
  }
  func.func @transform_8(%arg0: i32) -> (i32, i32) {
    %c0_i32 = arith.constant 0 : i32
    %c0_i32_0 = arith.constant 0 : i32
    %c0_i32_1 = arith.constant 0 : i32
    return %c0_i32, %c0_i32_0 : i32, i32
  }
  func.func @transform_9(%arg0: i32) -> (i32, i32) {
    %c0_i32 = arith.constant 0 : i32
    %c0_i32_0 = arith.constant 0 : i32
    %c0_i32_1 = arith.constant 0 : i32
    return %c0_i32, %c0_i32_0 : i32, i32
  }
  func.func @transform_10(%arg0: i32) -> (i32, i32) {
    %c0_i32 = arith.constant 0 : i32
    %c0_i32_0 = arith.constant 0 : i32
    %c0_i32_1 = arith.constant 0 : i32
    return %c0_i32, %c0_i32_0 : i32, i32
  }
  func.func @transform_11(%arg0: i32) -> (i32, i32) {
    %c0_i32 = arith.constant 0 : i32
    %c0_i32_0 = arith.constant 0 : i32
    return %arg0, %c0_i32 : i32, i32
  }
  func.func @transform_12(%arg0: i32) -> (i32, i32) {
    %c0_i32 = arith.constant 0 : i32
    %c0_i32_0 = arith.constant 0 : i32
    return %arg0, %c0_i32 : i32, i32
  }
  func.func @transform_13(%arg0: i32) -> (i32, i32) {
    %c0_i32 = arith.constant 0 : i32
    %c0_i32_0 = arith.constant 0 : i32
    return %arg0, %c0_i32 : i32, i32
  }
  func.func @transform_14(%arg0: i32) -> (i32, i32) {
    %c0_i32 = arith.constant 0 : i32
    %c0_i32_0 = arith.constant 0 : i32
    return %arg0, %c0_i32 : i32, i32
  }
}

</mosaic_0001>

<llo_original>
// kernel: tpu_custom_call.1
$region0: #{tpu_custom_call.1}
  #allocation0 [shape = 'u32[]', space=smem, size = 0x4, offset = 0x4, fixed_abs, tag = 'smem constant byte address 0x4 - core index']
  #allocation1 [shape = 'u32[72,128]{1,0:T(1,128)}', space=vmem, size = 0x9000, scoped, tag = 'internal scratch']
  %s0 = inlined_call_operand.vmem [shape: f32[256,128], index: 0, kind: input, shape index: {}]
  %s1 = inlined_call_operand.vmem [shape: f32[256,128], index: 1, kind: input, shape index: {}]
  %s2 = inlined_call_operand.vmem [shape: f32[256,16], index: 2, kind: input, shape index: {}]
  %s3 = inlined_call_operand.vmem [shape: f32[128,64], index: 3, kind: input, shape index: {}]
  %s4 = inlined_call_operand.vmem [shape: f32[1,64], index: 4, kind: input, shape index: {}]
  %s5 = inlined_call_operand.vmem [shape: f32[64,32], index: 5, kind: input, shape index: {}]
  %s6 = inlined_call_operand.vmem [shape: f32[1,32], index: 6, kind: input, shape index: {}]
  %s7 = inlined_call_operand.vmem [shape: f32[128,32], index: 7, kind: input, shape index: {}]
  %s8 = inlined_call_operand.vmem [shape: f32[1,32], index: 8, kind: input, shape index: {}]
  %s9 = inlined_call_operand.vmem [shape: f32[32,16], index: 9, kind: input, shape index: {}]
  %s10 = inlined_call_operand.vmem [shape: f32[1,16], index: 10, kind: input, shape index: {}]
  %s11 = inlined_call_operand.vmem [shape: f32[256,1], index: 11, kind: output, shape index: {0}]
  %s12 = inlined_call_operand.vmem [shape: f32[256,16], index: 12, kind: output, shape index: {1}]
  %s13 = inlined_call_operand.vmem [shape: f32[256,16], index: 13, kind: output, shape index: {2}]
  %s14 = inlined_call_operand.vmem [shape: f32[256,16], index: 14, kind: output, shape index: {3}]
  %15 = xla_tuple %s11, %s12, %s13, %s14
  %s16 = sld [smem:[#allocation0]]
  $region101: #{tpu_custom_call.1} parent=0
    _
  %s18 = ssub.s32 1, %s16
  %s19 = scalar_select 0, %s18, %s16
  loop: start=0, step=1, limit=4
  $region2: #{tpu_custom_call.1} parent=0 // loop_pre_header
    _
  $region3: #{tpu_custom_call.1} parent=0 // loop_header
    %s21 = sphi 0, %s25
    %p22 = scmp.ge.s32.totalorder %s21, 4
    %s31 = sphi 0, %s33
    %s34 = sphi 0, %s31
    %s35 = sphi 0, %s34
    %s51 = sphi 0, %s35
    %s57 = sphi 0, %s59
    %s60 = sphi 0, %s57
    %s61 = sphi 0, %s60
    %s77 = sphi 0, %s61
    %s83 = sphi 0, %s85
    %s86 = sphi 0, %s83
    %s87 = sphi 0, %s86
    %s103 = sphi 0, %s87
    %s107 = sphi 0, %s107
    %s109 = sphi 0, %s107
    %s110 = sphi 0, %s109
    %s124 = sphi 0, %s110
    %s128 = sphi 0, %s128
    %s130 = sphi 0, %s128
    %s131 = sphi 0, %s130
    %s145 = sphi 0, %s131
    %s149 = sphi 0, %s149
    %s151 = sphi 0, %s149
    %s152 = sphi 0, %s151
    %s166 = sphi 0, %s152
    %s170 = sphi 0, %s170
    %s172 = sphi 0, %s170
    %s173 = sphi 0, %s172
    %s187 = sphi 0, %s173
    %s191 = sphi 0, %s191
    %s193 = sphi 0, %s191
    %s194 = sphi 0, %s193
    %s208 = sphi 0, %s194
    %s212 = sphi 0, %s212
    %s214 = sphi 0, %s212
    %s215 = sphi 0, %s214
    %s229 = sphi 0, %s215
    %s233 = sphi 0, %s233
    %s235 = sphi 0, %s233
    %s236 = sphi 0, %s235
    %s250 = sphi 0, %s236
    %s254 = sphi 0, %s254
    %s256 = sphi 0, %s254
    %s257 = sphi 0, %s256
    %s271 = sphi 0, %s257
    %s277 = sphi 0, %s279
    %s280 = sphi 0, %s277
    %s281 = sphi 0, %s280
    %s297 = sphi 0, %s281
    %s303 = sphi 0, %s305
    %s306 = sphi 0, %s303
    %s307 = sphi 0, %s306
    %s323 = sphi 0, %s307
    %s329 = sphi 0, %s331
    %s332 = sphi 0, %s329
    %s333 = sphi 0, %s332
    %s349 = sphi 0, %s333
    %s355 = sphi 0, %s357
    %s358 = sphi 0, %s355
    %s359 = sphi 0, %s358
    %s375 = sphi 0, %s359
  $region4: #{tpu_custom_call.1} parent=0 // loop_header_branch
    %24 = sbr.rel (%p22) target = $region8
  $region5: #{tpu_custom_call.1} parent=0 // loop_body
    %s26 = ssub.s32 %s21, 1
    %s27 = ssub.s32 %s21, 2
    %s28 = sadd.s32 %s21, 1
    %s29 = ssub.s32 %s21, %s28
    %p30 = scmp.eq.s32.totalorder %s29, 0
    %s32 = sadd.s32 %s31, 1
    %s33 = scalar_select %p30, %s31, %s32
    %p36 = pneg %p30
    %p37 = scmp.eq.s32.totalorder %s21, 1
    %p38 = por %p36, %p37
    %p39 = scmp.ne.s32.totalorder %s31, %s34
    %p40 = scmp.eq.s32.totalorder %s21, 0
    %p41 = por %p39, %p40
    %p42 = scmp.ne.s32.totalorder %s31, %s34
    %p43 = scmp.eq.s32.totalorder %s26, 1
    %p44 = por %p42, %p43
    %p45 = scmp.ne.s32.totalorder %s34, %s35
    %p46 = scmp.eq.s32.totalorder %s26, 0
    %p47 = por %p45, %p46
    %p48 = scmp.ne.s32.totalorder %s34, %s35
    %p49 = scmp.eq.s32.totalorder %s27, 1
    %p50 = por %p48, %p49
    %p52 = scmp.ne.s32.totalorder %s35, %s51
    %p53 = scmp.eq.s32.totalorder %s27, 0
    %p54 = por %p52, %p53
    %s55 = ssub.s32 %s21, %s28
    %p56 = scmp.eq.s32.totalorder %s55, 0
    %s58 = sadd.s32 %s57, 1
    %s59 = scalar_select %p56, %s57, %s58
    %p62 = pneg %p56
    %p63 = scmp.eq.s32.totalorder %s21, 1
    %p64 = por %p62, %p63
    %p65 = scmp.ne.s32.totalorder %s57, %s60
    %p66 = scmp.eq.s32.totalorder %s21, 0
    %p67 = por %p65, %p66
    %p68 = scmp.ne.s32.totalorder %s57, %s60
    %p69 = scmp.eq.s32.totalorder %s26, 1
    %p70 = por %p68, %p69
    %p71 = scmp.ne.s32.totalorder %s60, %s61
    %p72 = scmp.eq.s32.totalorder %s26, 0
    %p73 = por %p71, %p72
    %p74 = scmp.ne.s32.totalorder %s60, %s61
    %p75 = scmp.eq.s32.totalorder %s27, 1
    %p76 = por %p74, %p75
    %p78 = scmp.ne.s32.totalorder %s61, %s77
    %p79 = scmp.eq.s32.totalorder %s27, 0
    %p80 = por %p78, %p79
    %s81 = ssub.s32 %s21, %s28
    %p82 = scmp.eq.s32.totalorder %s81, 0
    %s84 = sadd.s32 %s83, 1
    %s85 = scalar_select %p82, %s83, %s84
    %p88 = pneg %p82
    %p89 = scmp.eq.s32.totalorder %s21, 1
    %p90 = por %p88, %p89
    %p91 = scmp.ne.s32.totalorder %s83, %s86
    %p92 = scmp.eq.s32.totalorder %s21, 0
    %p93 = por %p91, %p92
    %p94 = scmp.ne.s32.totalorder %s83, %s86
    %p95 = scmp.eq.s32.totalorder %s26, 1
    %p96 = por %p94, %p95
    %p97 = scmp.ne.s32.totalorder %s86, %s87
    %p98 = scmp.eq.s32.totalorder %s26, 0
    %p99 = por %p97, %p98
    %p100 = scmp.ne.s32.totalorder %s86, %s87
    %p101 = scmp.eq.s32.totalorder %s27, 1
    %p102 = por %p100, %p101
    %p104 = scmp.ne.s32.totalorder %s87, %s103
    %p105 = scmp.eq.s32.totalorder %s27, 0
    %p106 = por %p104, %p105
    %s108 = sadd.s32 %s107, 1
    %p111 = scmp.eq.s32.totalorder %s21, 1
    %p112 = scmp.ne.s32.totalorder %s107, %s109
    %p113 = scmp.eq.s32.totalorder %s21, 0
    %p114 = por %p112, %p113
    %p115 = scmp.ne.s32.totalorder %s107, %s109
    %p116 = scmp.eq.s32.totalorder %s26, 1
    %p117 = por %p115, %p116
    %p118 = scmp.ne.s32.totalorder %s109, %s110
    %p119 = scmp.eq.s32.totalorder %s26, 0
    %p120 = por %p118, %p119
    %p121 = scmp.ne.s32.totalorder %s109, %s110
    %p122 = scmp.eq.s32.totalorder %s27, 1
    %p123 = por %p121, %p122
    %p125 = scmp.ne.s32.totalorder %s110, %s124
    %p126 = scmp.eq.s32.totalorder %s27, 0
    %p127 = por %p125, %p126
    %s129 = sadd.s32 %s128, 1
    %p132 = scmp.eq.s32.totalorder %s21, 1
    %p133 = scmp.ne.s32.totalorder %s128, %s130
    %p134 = scmp.eq.s32.totalorder %s21, 0
    %p135 = por %p133, %p134
    %p136 = scmp.ne.s32.totalorder %s128, %s130
    %p137 = scmp.eq.s32.totalorder %s26, 1
    %p138 = por %p136, %p137
    %p139 = scmp.ne.s32.totalorder %s130, %s131
    %p140 = scmp.eq.s32.totalorder %s26, 0
    %p141 = por %p139, %p140
    %p142 = scmp.ne.s32.totalorder %s130, %s131
    %p143 = scmp.eq.s32.totalorder %s27, 1
    %p144 = por %p142, %p143
    %p146 = scmp.ne.s32.totalorder %s131, %s145
    %p147 = scmp.eq.s32.totalorder %s27, 0
    %p148 = por %p146, %p147
    %s150 = sadd.s32 %s149, 1
    %p153 = scmp.eq.s32.totalorder %s21, 1
    %p154 = scmp.ne.s32.totalorder %s149, %s151
    %p155 = scmp.eq.s32.totalorder %s21, 0
    %p156 = por %p154, %p155
    %p157 = scmp.ne.s32.totalorder %s149, %s151
    %p158 = scmp.eq.s32.totalorder %s26, 1
    %p159 = por %p157, %p158
    %p160 = scmp.ne.s32.totalorder %s151, %s152
    %p161 = scmp.eq.s32.totalorder %s26, 0
    %p162 = por %p160, %p161
    %p163 = scmp.ne.s32.totalorder %s151, %s152
    %p164 = scmp.eq.s32.totalorder %s27, 1
    %p165 = por %p163, %p164
    %p167 = scmp.ne.s32.totalorder %s152, %s166
    %p168 = scmp.eq.s32.totalorder %s27, 0
    %p169 = por %p167, %p168
    %s171 = sadd.s32 %s170, 1
    %p174 = scmp.eq.s32.totalorder %s21, 1
    %p175 = scmp.ne.s32.totalorder %s170, %s172
    %p176 = scmp.eq.s32.totalorder %s21, 0
    %p177 = por %p175, %p176
    %p178 = scmp.ne.s32.totalorder %s170, %s172
    %p179 = scmp.eq.s32.totalorder %s26, 1
    %p180 = por %p178, %p179
    %p181 = scmp.ne.s32.totalorder %s172, %s173
    %p182 = scmp.eq.s32.totalorder %s26, 0
    %p183 = por %p181, %p182
    %p184 = scmp.ne.s32.totalorder %s172, %s173
    %p185 = scmp.eq.s32.totalorder %s27, 1
    %p186 = por %p184, %p185
    %p188 = scmp.ne.s32.totalorder %s173, %s187
    %p189 = scmp.eq.s32.totalorder %s27, 0
    %p190 = por %p188, %p189
    %s192 = sadd.s32 %s191, 1
    %p195 = scmp.eq.s32.totalorder %s21, 1
    %p196 = scmp.ne.s32.totalorder %s191, %s193
    %p197 = scmp.eq.s32.totalorder %s21, 0
    %p198 = por %p196, %p197
    %p199 = scmp.ne.s32.totalorder %s191, %s193
    %p200 = scmp.eq.s32.totalorder %s26, 1
    %p201 = por %p199, %p200
    %p202 = scmp.ne.s32.totalorder %s193, %s194
    %p203 = scmp.eq.s32.totalorder %s26, 0
    %p204 = por %p202, %p203
    %p205 = scmp.ne.s32.totalorder %s193, %s194
    %p206 = scmp.eq.s32.totalorder %s27, 1
    %p207 = por %p205, %p206
    %p209 = scmp.ne.s32.totalorder %s194, %s208
    %p210 = scmp.eq.s32.totalorder %s27, 0
    %p211 = por %p209, %p210
    %s213 = sadd.s32 %s212, 1
    %p216 = scmp.eq.s32.totalorder %s21, 1
    %p217 = scmp.ne.s32.totalorder %s212, %s214
    %p218 = scmp.eq.s32.totalorder %s21, 0
    %p219 = por %p217, %p218
    %p220 = scmp.ne.s32.totalorder %s212, %s214
    %p221 = scmp.eq.s32.totalorder %s26, 1
    %p222 = por %p220, %p221
    %p223 = scmp.ne.s32.totalorder %s214, %s215
    %p224 = scmp.eq.s32.totalorder %s26, 0
    %p225 = por %p223, %p224
    %p226 = scmp.ne.s32.totalorder %s214, %s215
    %p227 = scmp.eq.s32.totalorder %s27, 1
    %p228 = por %p226, %p227
    %p230 = scmp.ne.s32.totalorder %s215, %s229
    %p231 = scmp.eq.s32.totalorder %s27, 0
    %p232 = por %p230, %p231
    %s234 = sadd.s32 %s233, 1
    %p237 = scmp.eq.s32.totalorder %s21, 1
    %p238 = scmp.ne.s32.totalorder %s233, %s235
    %p239 = scmp.eq.s32.totalorder %s21, 0
    %p240 = por %p238, %p239
    %p241 = scmp.ne.s32.totalorder %s233, %s235
    %p242 = scmp.eq.s32.totalorder %s26, 1
    %p243 = por %p241, %p242
    %p244 = scmp.ne.s32.totalorder %s235, %s236
    %p245 = scmp.eq.s32.totalorder %s26, 0
    %p246 = por %p244, %p245
    %p247 = scmp.ne.s32.totalorder %s235, %s236
    %p248 = scmp.eq.s32.totalorder %s27, 1
    %p249 = por %p247, %p248
    %p251 = scmp.ne.s32.totalorder %s236, %s250
    %p252 = scmp.eq.s32.totalorder %s27, 0
    %p253 = por %p251, %p252
    %s255 = sadd.s32 %s254, 1
    %p258 = scmp.eq.s32.totalorder %s21, 1
    %p259 = scmp.ne.s32.totalorder %s254, %s256
    %p260 = scmp.eq.s32.totalorder %s21, 0
    %p261 = por %p259, %p260
    %p262 = scmp.ne.s32.totalorder %s254, %s256
    %p263 = scmp.eq.s32.totalorder %s26, 1
    %p264 = por %p262, %p263
    %p265 = scmp.ne.s32.totalorder %s256, %s257
    %p266 = scmp.eq.s32.totalorder %s26, 0
    %p267 = por %p265, %p266
    %p268 = scmp.ne.s32.totalorder %s256, %s257
    %p269 = scmp.eq.s32.totalorder %s27, 1
    %p270 = por %p268, %p269
    %p272 = scmp.ne.s32.totalorder %s257, %s271
    %p273 = scmp.eq.s32.totalorder %s27, 0
    %p274 = por %p272, %p273
    %s275 = ssub.s32 %s21, %s28
    %p276 = scmp.eq.s32.totalorder %s275, 0
    %s278 = sadd.s32 %s277, 1
    %s279 = scalar_select %p276, %s277, %s278
    %p282 = pneg %p276
    %p283 = scmp.eq.s32.totalorder %s21, 1
    %p284 = por %p282, %p283
    %p285 = scmp.ne.s32.totalorder %s277, %s280
    %p286 = scmp.eq.s32.totalorder %s21, 0
    %p287 = por %p285, %p286
    %p288 = scmp.ne.s32.totalorder %s277, %s280
    %p289 = scmp.eq.s32.totalorder %s26, 1
    %p290 = por %p288, %p289
    %p291 = scmp.ne.s32.totalorder %s280, %s281
    %p292 = scmp.eq.s32.totalorder %s26, 0
    %p293 = por %p291, %p292
    %p294 = scmp.ne.s32.totalorder %s280, %s281
    %p295 = scmp.eq.s32.totalorder %s27, 1
    %p296 = por %p294, %p295
    %p298 = scmp.ne.s32.totalorder %s281, %s297
    %p299 = scmp.eq.s32.totalorder %s27, 0
    %p300 = por %p298, %p299
    %s301 = ssub.s32 %s21, %s28
    %p302 = scmp.eq.s32.totalorder %s301, 0
    %s304 = sadd.s32 %s303, 1
    %s305 = scalar_select %p302, %s303, %s304
    %p308 = pneg %p302
    %p309 = scmp.eq.s32.totalorder %s21, 1
    %p310 = por %p308, %p309
    %p311 = scmp.ne.s32.totalorder %s303, %s306
    %p312 = scmp.eq.s32.totalorder %s21, 0
    %p313 = por %p311, %p312
    %p314 = scmp.ne.s32.totalorder %s303, %s306
    %p315 = scmp.eq.s32.totalorder %s26, 1
    %p316 = por %p314, %p315
    %p317 = scmp.ne.s32.totalorder %s306, %s307
    %p318 = scmp.eq.s32.totalorder %s26, 0
    %p319 = por %p317, %p318
    %p320 = scmp.ne.s32.totalorder %s306, %s307
    %p321 = scmp.eq.s32.totalorder %s27, 1
    %p322 = por %p320, %p321
    %p324 = scmp.ne.s32.totalorder %s307, %s323
    %p325 = scmp.eq.s32.totalorder %s27, 0
    %p326 = por %p324, %p325
    %s327 = ssub.s32 %s21, %s28
    %p328 = scmp.eq.s32.totalorder %s327, 0
    %s330 = sadd.s32 %s329, 1
    %s331 = scalar_select %p328, %s329, %s330
    %p334 = pneg %p328
    %p335 = scmp.eq.s32.totalorder %s21, 1
    %p336 = por %p334, %p335
    %p337 = scmp.ne.s32.totalorder %s329, %s332
    %p338 = scmp.eq.s32.totalorder %s21, 0
    %p339 = por %p337, %p338
    %p340 = scmp.ne.s32.totalorder %s329, %s332
    %p341 = scmp.eq.s32.totalorder %s26, 1
    %p342 = por %p340, %p341
    %p343 = scmp.ne.s32.totalorder %s332, %s333
    %p344 = scmp.eq.s32.totalorder %s26, 0
    %p345 = por %p343, %p344
    %p346 = scmp.ne.s32.totalorder %s332, %s333
    %p347 = scmp.eq.s32.totalorder %s27, 1
    %p348 = por %p346, %p347
    %p350 = scmp.ne.s32.totalorder %s333, %s349
    %p351 = scmp.eq.s32.totalorder %s27, 0
    %p352 = por %p350, %p351
    %s353 = ssub.s32 %s21, %s28
    %p354 = scmp.eq.s32.totalorder %s353, 0
    %s356 = sadd.s32 %s355, 1
    %s357 = scalar_select %p354, %s355, %s356
    %p360 = pneg %p354
    %p361 = scmp.eq.s32.totalorder %s21, 1
    %p362 = por %p360, %p361
    %p363 = scmp.ne.s32.totalorder %s355, %s358
    %p364 = scmp.eq.s32.totalorder %s21, 0
    %p365 = por %p363, %p364
    %p366 = scmp.ne.s32.totalorder %s355, %s358
    %p367 = scmp.eq.s32.totalorder %s26, 1
    %p368 = por %p366, %p367
    %p369 = scmp.ne.s32.totalorder %s358, %s359
    %p370 = scmp.eq.s32.totalorder %s26, 0
    %p371 = por %p369, %p370
    %p372 = scmp.ne.s32.totalorder %s358, %s359
    %p373 = scmp.eq.s32.totalorder %s27, 1
    %p374 = por %p372, %p373
    %p376 = scmp.ne.s32.totalorder %s359, %s375
    %p377 = scmp.eq.s32.totalorder %s27, 0
    %p378 = por %p376, %p377
    %p379 = scmp.le.s32.totalorder 1, %s21
    %p380 = scmp.lt.s32.totalorder %s21, 3
    %p381 = pnand %p379, %p380
    %p382 = pneg %p381
    // Predicated region
    $region9: #{tpu_custom_call.1} parent=5 // pred_check
      _
    $region10: #{tpu_custom_call.1} parent=5 // pred_check_branch
      %384 = sbr.rel (%p381) target = $region12
    $region11: #{tpu_custom_call.1} parent=5 // pred_region
      %s385 = ssub.s32 %s21, 1
      // Predicated region
      $region13: #{tpu_custom_call.1} parent=11 // pred_check
        %p386 = pneg %p120
      $region14: #{tpu_custom_call.1} parent=11 // pred_check_branch
        %388 = sbr.rel (%p386) target = $region16
      $region15: #{tpu_custom_call.1} parent=11 // pred_region
        _
      $region16: #{tpu_custom_call.1} parent=11 // pred_fallthru
        _
      // Predicated region
      $region17: #{tpu_custom_call.1} parent=11 // pred_check
        %p389 = pneg %p141
      $region18: #{tpu_custom_call.1} parent=11 // pred_check_branch
        %391 = sbr.rel (%p389) target = $region20
      $region19: #{tpu_custom_call.1} parent=11 // pred_region
        _
      $region20: #{tpu_custom_call.1} parent=11 // pred_fallthru
        _
      // Predicated region
      $region21: #{tpu_custom_call.1} parent=11 // pred_check
        %p392 = pneg %p162
      $region22: #{tpu_custom_call.1} parent=11 // pred_check_branch
        %394 = sbr.rel (%p392) target = $region24
      $region23: #{tpu_custom_call.1} parent=11 // pred_region
        _
      $region24: #{tpu_custom_call.1} parent=11 // pred_fallthru
        _
      // Predicated region
      $region25: #{tpu_custom_call.1} parent=11 // pred_check
        %p395 = pneg %p183
      $region26: #{tpu_custom_call.1} parent=11 // pred_check_branch
        %397 = sbr.rel (%p395) target = $region28
      $region27: #{tpu_custom_call.1} parent=11 // pred_region
        _
      $region28: #{tpu_custom_call.1} parent=11 // pred_fallthru
        _
      // Predicated region
      $region29: #{tpu_custom_call.1} parent=11 // pred_check
        %p398 = pneg %p204
      $region30: #{tpu_custom_call.1} parent=11 // pred_check_branch
        %400 = sbr.rel (%p398) target = $region32
      $region31: #{tpu_custom_call.1} parent=11 // pred_region
        _
      $region32: #{tpu_custom_call.1} parent=11 // pred_fallthru
        _
      // Predicated region
      $region33: #{tpu_custom_call.1} parent=11 // pred_check
        %p401 = pneg %p225
      $region34: #{tpu_custom_call.1} parent=11 // pred_check_branch
        %403 = sbr.rel (%p401) target = $region36
      $region35: #{tpu_custom_call.1} parent=11 // pred_region
        _
      $region36: #{tpu_custom_call.1} parent=11 // pred_fallthru
        _
      // Predicated region
      $region37: #{tpu_custom_call.1} parent=11 // pred_check
        %p404 = pneg %p246
      $region38: #{tpu_custom_call.1} parent=11 // pred_check_branch
        %406 = sbr.rel (%p404) target = $region40
      $region39: #{tpu_custom_call.1} parent=11 // pred_region
        _
      $region40: #{tpu_custom_call.1} parent=11 // pred_fallthru
        _
      // Predicated region
      $region41: #{tpu_custom_call.1} parent=11 // pred_check
        %p407 = pneg %p267
      $region42: #{tpu_custom_call.1} parent=11 // pred_check_branch
        %409 = sbr.rel (%p407) target = $region44
      $region43: #{tpu_custom_call.1} parent=11 // pred_region
        _
      $region44: #{tpu_custom_call.1} parent=11 // pred_fallthru
        _
    $region12: #{tpu_custom_call.1} parent=5 // pred_fallthru
      _
    %p410 = scmp.lt.s32.totalorder %s21, 2
    // Predicated region
    $region45: #{tpu_custom_call.1} parent=5 // pred_check
      %p411 = pneg %p410
    $region46: #{tpu_custom_call.1} parent=5 // pred_check_branch
      %413 = sbr.rel (%p411) target = $region48
    $region47: #{tpu_custom_call.1} parent=5 // pred_region
      // Predicated region
      $region49: #{tpu_custom_call.1} parent=47 // pred_check
        %p414 = pneg %p41
      $region50: #{tpu_custom_call.1} parent=47 // pred_check_branch
        %416 = sbr.rel (%p414) target = $region52
      $region51: #{tpu_custom_call.1} parent=47 // pred_region
        %s417 = smul.u32 16, %s21
        %p418 = scmp.lt.s32.totalorder %s417, 31
        %s419 = scalar_select %p418, %s417, 31
        %s420 = smul.addr %s419, 8
        %s421 = scalar_lea.vmem %s0, %s420
        %s422 = smul.u32 16, %s21
      $region52: #{tpu_custom_call.1} parent=47 // pred_fallthru
        _
      // Predicated region
      $region53: #{tpu_custom_call.1} parent=47 // pred_check
        %p423 = pneg %p67
      $region54: #{tpu_custom_call.1} parent=47 // pred_check_branch
        %425 = sbr.rel (%p423) target = $region56
      $region55: #{tpu_custom_call.1} parent=47 // pred_region
        %s426 = smul.u32 16, %s21
        %p427 = scmp.lt.s32.totalorder %s426, 31
        %s428 = scalar_select %p427, %s426, 31
        %s429 = smul.addr %s428, 8
        %s430 = scalar_lea.vmem %s1, %s429
        %s431 = smul.u32 16, %s21
      $region56: #{tpu_custom_call.1} parent=47 // pred_fallthru
        _
      // Predicated region
      $region57: #{tpu_custom_call.1} parent=47 // pred_check
        %p432 = pneg %p93
      $region58: #{tpu_custom_call.1} parent=47 // pred_check_branch
        %434 = sbr.rel (%p432) target = $region60
      $region59: #{tpu_custom_call.1} parent=47 // pred_region
        %s435 = smul.u32 16, %s21
        %p436 = scmp.lt.s32.totalorder %s435, 31
        %s437 = scalar_select %p436, %s435, 31
        %s438 = smul.addr %s437, 8
        %s439 = scalar_lea.vmem %s2, %s438
        %s440 = smul.u32 16, %s21
      $region60: #{tpu_custom_call.1} parent=47 // pred_fallthru
        _
    $region48: #{tpu_custom_call.1} parent=5 // pred_fallthru
      _
    %p441 = scmp.le.s32.totalorder 1, %s21
    %p442 = scmp.lt.s32.totalorder %s21, 3
    %p443 = pnand %p441, %p442
    %p444 = pneg %p443
    // Predicated region
    $region61: #{tpu_custom_call.1} parent=5 // pred_check
      _
    $region62: #{tpu_custom_call.1} parent=5 // pred_check_branch
      %446 = sbr.rel (%p443) target = $region64
    $region63: #{tpu_custom_call.1} parent=5 // pred_region
      %s447 = ssub.s32 %s21, 1
      %s448 = smul.u32 16, %s26
      %p449 = scmp.lt.s32.totalorder %s448, 31
      %s450 = scalar_select %p449, %s448, 31
      %s451 = smul.addr %s450, 8
      %s452 = scalar_lea.vmem %s0, %s451
      %p453 = pneg %p47
      %p454 = pneg %p44
      %s455 = smul.u32 16, %s26
      %p456 = scmp.lt.s32.totalorder %s455, 31
      %s457 = scalar_select %p456, %s455, 31
      %s458 = smul.addr %s457, 8
      %s459 = scalar_lea.vmem %s1, %s458
      %p460 = pneg %p73
      %p461 = pneg %p70
      %s462 = smul.u32 16, %s26
      %p463 = scmp.lt.s32.totalorder %s462, 31
      %s464 = scalar_select %p463, %s462, 31
      %s465 = smul.addr %s464, 8
      %s466 = scalar_lea.vmem %s2, %s465
      %p467 = pneg %p99
      %p468 = pneg %p96
      %p469 = pneg %p120
      %p470 = pneg %p117
      %p471 = pneg %p141
      %p472 = pneg %p138
      %p473 = pneg %p162
      %p474 = pneg %p159
      %p475 = pneg %p183
      %p476 = pneg %p180
      %p477 = pneg %p204
      %p478 = pneg %p201
      %p479 = pneg %p225
      %p480 = pneg %p222
      %p481 = pneg %p246
      %p482 = pneg %p243
      %p483 = pneg %p267
      %p484 = pneg %p264
      %p485 = pneg %p293
      %p486 = pneg %p290
      %s487 = smul.u32 16, %s26
      %p488 = scmp.lt.s32.totalorder %s487, 31
      %s489 = scalar_select %p488, %s487, 31
      %s490 = smul.addr %s489, 8
      %s491 = scalar_lea.vmem %s11, %s490
      %p492 = pneg %p319
      %p493 = pneg %p316
      %s494 = smul.u32 16, %s26
      %p495 = scmp.lt.s32.totalorder %s494, 31
      %s496 = scalar_select %p495, %s494, 31
      %s497 = smul.addr %s496, 8
      %s498 = scalar_lea.vmem %s12, %s497
      %p499 = pneg %p345
      %p500 = pneg %p342
      %s501 = smul.u32 16, %s26
      %p502 = scmp.lt.s32.totalorder %s501, 31
      %s503 = scalar_select %p502, %s501, 31
      %s504 = smul.addr %s503, 8
      %s505 = scalar_lea.vmem %s13, %s504
      %p506 = pneg %p371
      %p507 = pneg %p368
      %s508 = smul.u32 16, %s26
      %p509 = scmp.lt.s32.totalorder %s508, 31
      %s510 = scalar_select %p509, %s508, 31
      %s511 = smul.addr %s510, 8
      %s512 = scalar_lea.vmem %s14, %s511
      %s513 = smul.u32 16, %s26
      %p514 = scmp.lt.s32.totalorder %s513, 31
      %s515 = scalar_select %p514, %s513, 31
      %s516 = smul.addr %s515, 8
      %s517 = scalar_lea.vmem %s0, %s516
      %s518 = smul.u32 16, %s26
      %s519 = smul.u32 16, %s26
      %p520 = scmp.lt.s32.totalorder %s519, 31
      %s521 = scalar_select %p520, %s519, 31
      %s522 = smul.addr %s521, 8
      %s523 = scalar_lea.vmem %s1, %s522
      %s524 = smul.u32 16, %s26
      %s525 = smul.u32 16, %s26
      %p526 = scmp.lt.s32.totalorder %s525, 31
      %s527 = scalar_select %p526, %s525, 31
      %s528 = smul.addr %s527, 8
      %s529 = scalar_lea.vmem %s2, %s528
      %s530 = smul.u32 16, %s26
      %s531 = smul.u32 16, %s26
      %p532 = scmp.lt.s32.totalorder %s531, 31
      %s533 = scalar_select %p532, %s531, 31
      %s534 = smul.addr %s533, 8
      %s535 = scalar_lea.vmem %s11, %s534
      %s536 = smul.u32 16, %s26
      %s537 = smul.u32 16, %s26
      %p538 = scmp.lt.s32.totalorder %s537, 31
      %s539 = scalar_select %p538, %s537, 31
      %s540 = smul.addr %s539, 8
      %s541 = scalar_lea.vmem %s12, %s540
      %s542 = smul.u32 16, %s26
      %s543 = smul.u32 16, %s26
      %p544 = scmp.lt.s32.totalorder %s543, 31
      %s545 = scalar_select %p544, %s543, 31
      %s546 = smul.addr %s545, 8
      %s547 = scalar_lea.vmem %s13, %s546
      %s548 = smul.u32 16, %s26
      %s549 = smul.u32 16, %s26
      %p550 = scmp.lt.s32.totalorder %s549, 31
      %s551 = scalar_select %p550, %s549, 31
      %s552 = smul.addr %s551, 8
      %s553 = scalar_lea.vmem %s14, %s552
      %s554 = smul.u32 16, %s26
      %v555 = vld [vmem:[%s517] sm:$0xff]
      %v556 = vld [vmem:[%s517 + $0x8] sm:$0xff]
      %v557 = vld [vmem:[%s517 + $0x10] sm:$0xff]
      %v558 = vld [vmem:[%s517 + $0x18] sm:$0xff]
      %v559 = vld [vmem:[%s517 + $0x20] sm:$0xff]
      %v560 = vld [vmem:[%s517 + $0x28] sm:$0xff]
      %v561 = vld [vmem:[%s517 + $0x30] sm:$0xff]
      %v562 = vld [vmem:[%s517 + $0x38] sm:$0xff]
      %v563 = vld [vmem:[%s517 + $0x40] sm:$0xff]
      %v564 = vld [vmem:[%s517 + $0x48] sm:$0xff]
      %v565 = vld [vmem:[%s517 + $0x50] sm:$0xff]
      %v566 = vld [vmem:[%s517 + $0x58] sm:$0xff]
      %v567 = vld [vmem:[%s517 + $0x60] sm:$0xff]
      %v568 = vld [vmem:[%s517 + $0x68] sm:$0xff]
      %v569 = vld [vmem:[%s517 + $0x70] sm:$0xff]
      %v570 = vld [vmem:[%s517 + $0x78] sm:$0xff]
      %v571 = vld [vmem:[%s523] sm:$0xff]
      %v572 = vld [vmem:[%s523 + $0x8] sm:$0xff]
      %v573 = vld [vmem:[%s523 + $0x10] sm:$0xff]
      %v574 = vld [vmem:[%s523 + $0x18] sm:$0xff]
      %v575 = vld [vmem:[%s523 + $0x20] sm:$0xff]
      %v576 = vld [vmem:[%s523 + $0x28] sm:$0xff]
      %v577 = vld [vmem:[%s523 + $0x30] sm:$0xff]
      %v578 = vld [vmem:[%s523 + $0x38] sm:$0xff]
      %v579 = vld [vmem:[%s523 + $0x40] sm:$0xff]
      %v580 = vld [vmem:[%s523 + $0x48] sm:$0xff]
      %v581 = vld [vmem:[%s523 + $0x50] sm:$0xff]
      %v582 = vld [vmem:[%s523 + $0x58] sm:$0xff]
      %v583 = vld [vmem:[%s523 + $0x60] sm:$0xff]
      %v584 = vld [vmem:[%s523 + $0x68] sm:$0xff]
      %v585 = vld [vmem:[%s523 + $0x70] sm:$0xff]
      %v586 = vld [vmem:[%s523 + $0x78] sm:$0xff]
      %v587 = vld [vmem:[%s3] sm:$0xff]
      %v588 = vld [vmem:[%s3 + $0x8] sm:$0xff]
      %v589 = vld [vmem:[%s3 + $0x10] sm:$0xff]
      %v590 = vld [vmem:[%s3 + $0x18] sm:$0xff]
      %v591 = vld [vmem:[%s3 + $0x20] sm:$0xff]
      %v592 = vld [vmem:[%s3 + $0x28] sm:$0xff]
      %v593 = vld [vmem:[%s3 + $0x30] sm:$0xff]
      %v594 = vld [vmem:[%s3 + $0x38] sm:$0xff]
      %v595 = vld [vmem:[%s3 + $0x40] sm:$0xff]
      %v596 = vld [vmem:[%s3 + $0x48] sm:$0xff]
      %v597 = vld [vmem:[%s3 + $0x50] sm:$0xff]
      %v598 = vld [vmem:[%s3 + $0x58] sm:$0xff]
      %v599 = vld [vmem:[%s3 + $0x60] sm:$0xff]
      %v600 = vld [vmem:[%s3 + $0x68] sm:$0xff]
      %v601 = vld [vmem:[%s3 + $0x70] sm:$0xff]
      %v602 = vld [vmem:[%s3 + $0x78] sm:$0xff]
      %v603 = vld [vmem:[%s4] sm:$0x1]
      %v605 = vperm.slane %v603, 0
      %607 = vmatpush.msra.mxu0 %v602
      %608 = vmatpush.msra.mxu0 %v601
      %609 = vmatpush.msra.mxu0 %v600
      %610 = vmatpush.msra.mxu0 %v599
      %611 = vmatpush.msra.mxu0 %v598
      %612 = vmatpush.msra.mxu0 %v597
      %613 = vmatpush.msra.mxu0 %v596
      %614 = vmatpush.msra.mxu0 %v595
      %615 = vmatpush.msra.mxu0 %v594
      %616 = vmatpush.msra.mxu0 %v593
      %617 = vmatpush.msra.mxu0 %v592
      %618 = vmatpush.msra.mxu0 %v591
      %619 = vmatpush.msra.mxu0 %v590
      %620 = vmatpush.msra.mxu0 %v589
      %621 = vmatpush.msra.mxu0 %v588
      %622 = vmatpush.msra.mxu0 %v587
      %623 = vmatmul.f32.gmra.mxu0 %v555
      %v624 = vpop.f32.mrf.mxu0
      %v625 = vadd.f32 %v605, %v624
      %626 = vmatmul.f32.gmra.mxu0 %v556
      %v627 = vpop.f32.mrf.mxu0
      %v628 = vadd.f32 %v605, %v627
      %629 = vmatmul.f32.gmra.mxu0 %v557
      %v630 = vpop.f32.mrf.mxu0
      %v631 = vadd.f32 %v605, %v630
      %632 = vmatmul.f32.gmra.mxu0 %v558
      %v633 = vpop.f32.mrf.mxu0
      %v634 = vadd.f32 %v605, %v633
      %635 = vmatmul.f32.gmra.mxu0 %v559
      %v636 = vpop.f32.mrf.mxu0
      %v637 = vadd.f32 %v605, %v636
      %638 = vmatmul.f32.gmra.mxu0 %v560
      %v639 = vpop.f32.mrf.mxu0
      %v640 = vadd.f32 %v605, %v639
      %641 = vmatmul.f32.gmra.mxu0 %v561
      %v642 = vpop.f32.mrf.mxu0
      %v643 = vadd.f32 %v605, %v642
      %644 = vmatmul.f32.gmra.mxu0 %v562
      %v645 = vpop.f32.mrf.mxu0
      %v646 = vadd.f32 %v605, %v645
      %647 = vmatmul.f32.gmra.mxu0 %v563
      %v648 = vpop.f32.mrf.mxu0
      %v649 = vadd.f32 %v605, %v648
      %650 = vmatmul.f32.gmra.mxu0 %v564
      %v651 = vpop.f32.mrf.mxu0
      %v652 = vadd.f32 %v605, %v651
      %653 = vmatmul.f32.gmra.mxu0 %v565
      %v654 = vpop.f32.mrf.mxu0
      %v655 = vadd.f32 %v605, %v654
      %656 = vmatmul.f32.gmra.mxu0 %v566
      %v657 = vpop.f32.mrf.mxu0
      %v658 = vadd.f32 %v605, %v657
      %659 = vmatmul.f32.gmra.mxu0 %v567
      %v660 = vpop.f32.mrf.mxu0
      %v661 = vadd.f32 %v605, %v660
      %662 = vmatmul.f32.gmra.mxu0 %v568
      %v663 = vpop.f32.mrf.mxu0
      %v664 = vadd.f32 %v605, %v663
      %665 = vmatmul.f32.gmra.mxu0 %v569
      %v666 = vpop.f32.mrf.mxu0
      %v667 = vadd.f32 %v605, %v666
      %668 = vmatmul.f32.gmra.mxu0 %v570
      %v669 = vpop.f32.mrf.mxu0
      %v670 = vadd.f32 %v605, %v669
      %671 = vdwg.mxu0
      %v672 = vmax.f32 %v625, 0.0
      %v673 = vmax.f32 %v628, 0.0
      %v674 = vmax.f32 %v631, 0.0
      %v675 = vmax.f32 %v634, 0.0
      %v676 = vmax.f32 %v637, 0.0
      %v677 = vmax.f32 %v640, 0.0
      %v678 = vmax.f32 %v643, 0.0
      %v679 = vmax.f32 %v646, 0.0
      %v680 = vmax.f32 %v649, 0.0
      %v681 = vmax.f32 %v652, 0.0
      %v682 = vmax.f32 %v655, 0.0
      %v683 = vmax.f32 %v658, 0.0
      %v684 = vmax.f32 %v661, 0.0
      %v685 = vmax.f32 %v664, 0.0
      %v686 = vmax.f32 %v667, 0.0
      %v687 = vmax.f32 %v670, 0.0
      %v688 = vld [vmem:[%s5] sm:$0xff]
      %v689 = vld [vmem:[%s5 + $0x8] sm:$0xff]
      %v690 = vld [vmem:[%s5 + $0x10] sm:$0xff]
      %v691 = vld [vmem:[%s5 + $0x18] sm:$0xff]
      %v692 = vld [vmem:[%s5 + $0x20] sm:$0xff]
      %v693 = vld [vmem:[%s5 + $0x28] sm:$0xff]
      %v694 = vld [vmem:[%s5 + $0x30] sm:$0xff]
      %v695 = vld [vmem:[%s5 + $0x38] sm:$0xff]
      %v696 = vld [vmem:[%s6] sm:$0x1]
      %v698 = vperm.slane %v696, 0
      %vm700 = vcmask 523264
      %v702 = vsel %vm700, %v672, 0
      %v705 = vsel %vm700, %v673, 0
      %v708 = vsel %vm700, %v674, 0
      %v711 = vsel %vm700, %v675, 0
      %v714 = vsel %vm700, %v676, 0
      %v717 = vsel %vm700, %v677, 0
      %v720 = vsel %vm700, %v678, 0
      %v723 = vsel %vm700, %v679, 0
      %v726 = vsel %vm700, %v680, 0
      %v729 = vsel %vm700, %v681, 0
      %v732 = vsel %vm700, %v682, 0
      %v735 = vsel %vm700, %v683, 0
      %v738 = vsel %vm700, %v684, 0
      %v741 = vsel %vm700, %v685, 0
      %v744 = vsel %vm700, %v686, 0
      %v747 = vsel %vm700, %v687, 0
      %749 = vmatpush.msra.mxu0 0.0
      %750 = vmatpush.msra.mxu0 0.0
      %751 = vmatpush.msra.mxu0 0.0
      %752 = vmatpush.msra.mxu0 0.0
      %753 = vmatpush.msra.mxu0 0.0
      %754 = vmatpush.msra.mxu0 0.0
      %755 = vmatpush.msra.mxu0 0.0
      %756 = vmatpush.msra.mxu0 0.0
      %757 = vmatpush.msra.mxu0 %v695
      %758 = vmatpush.msra.mxu0 %v694
      %759 = vmatpush.msra.mxu0 %v693
      %760 = vmatpush.msra.mxu0 %v692
      %761 = vmatpush.msra.mxu0 %v691
      %762 = vmatpush.msra.mxu0 %v690
      %763 = vmatpush.msra.mxu0 %v689
      %764 = vmatpush.msra.mxu0 %v688
      %765 = vmatmul.f32.gmra.mxu0 %v702
      %v766 = vpop.f32.mrf.mxu0
      %v767 = vadd.f32 %v698, %v766
      %768 = vmatmul.f32.gmra.mxu0 %v705
      %v769 = vpop.f32.mrf.mxu0
      %v770 = vadd.f32 %v698, %v769
      %771 = vmatmul.f32.gmra.mxu0 %v708
      %v772 = vpop.f32.mrf.mxu0
      %v773 = vadd.f32 %v698, %v772
      %774 = vmatmul.f32.gmra.mxu0 %v711
      %v775 = vpop.f32.mrf.mxu0
      %v776 = vadd.f32 %v698, %v775
      %777 = vmatmul.f32.gmra.mxu0 %v714
      %v778 = vpop.f32.mrf.mxu0
      %v779 = vadd.f32 %v698, %v778
      %780 = vmatmul.f32.gmra.mxu0 %v717
      %v781 = vpop.f32.mrf.mxu0
      %v782 = vadd.f32 %v698, %v781
      %783 = vmatmul.f32.gmra.mxu0 %v720
      %v784 = vpop.f32.mrf.mxu0
      %v785 = vadd.f32 %v698, %v784
      %786 = vmatmul.f32.gmra.mxu0 %v723
      %v787 = vpop.f32.mrf.mxu0
      %v788 = vadd.f32 %v698, %v787
      %789 = vmatmul.f32.gmra.mxu0 %v726
      %v790 = vpop.f32.mrf.mxu0
      %v791 = vadd.f32 %v698, %v790
      %792 = vmatmul.f32.gmra.mxu0 %v729
      %v793 = vpop.f32.mrf.mxu0
      %v794 = vadd.f32 %v698, %v793
      %795 = vmatmul.f32.gmra.mxu0 %v732
      %v796 = vpop.f32.mrf.mxu0
      %v797 = vadd.f32 %v698, %v796
      %798 = vmatmul.f32.gmra.mxu0 %v735
      %v799 = vpop.f32.mrf.mxu0
      %v800 = vadd.f32 %v698, %v799
      %801 = vmatmul.f32.gmra.mxu0 %v738
      %v802 = vpop.f32.mrf.mxu0
      %v803 = vadd.f32 %v698, %v802
      %804 = vmatmul.f32.gmra.mxu0 %v741
      %v805 = vpop.f32.mrf.mxu0
      %v806 = vadd.f32 %v698, %v805
      %807 = vmatmul.f32.gmra.mxu0 %v744
      %v808 = vpop.f32.mrf.mxu0
      %v809 = vadd.f32 %v698, %v808
      %810 = vmatmul.f32.gmra.mxu0 %v747
      %v811 = vpop.f32.mrf.mxu0
      %v812 = vadd.f32 %v698, %v811
      %813 = vdwg.mxu0
      %v814 = vld [vmem:[%s529] sm:$0xff]
      %v815 = vld [vmem:[%s529 + $0x8] sm:$0xff]
      %v816 = vld [vmem:[%s529 + $0x10] sm:$0xff]
      %v817 = vld [vmem:[%s529 + $0x18] sm:$0xff]
      %v818 = vld [vmem:[%s529 + $0x20] sm:$0xff]
      %v819 = vld [vmem:[%s529 + $0x28] sm:$0xff]
      %v820 = vld [vmem:[%s529 + $0x30] sm:$0xff]
      %v821 = vld [vmem:[%s529 + $0x38] sm:$0xff]
      %v822 = vld [vmem:[%s529 + $0x40] sm:$0xff]
      %v823 = vld [vmem:[%s529 + $0x48] sm:$0xff]
      %v824 = vld [vmem:[%s529 + $0x50] sm:$0xff]
      %v825 = vld [vmem:[%s529 + $0x58] sm:$0xff]
      %v826 = vld [vmem:[%s529 + $0x60] sm:$0xff]
      %v827 = vld [vmem:[%s529 + $0x68] sm:$0xff]
      %v828 = vld [vmem:[%s529 + $0x70] sm:$0xff]
      %v829 = vld [vmem:[%s529 + $0x78] sm:$0xff]
      %v830 = vmul.f32 %v767, 0.5
      %v831 = vmul.f32 %v770, 0.5
      %v832 = vmul.f32 %v773, 0.5
      %v833 = vmul.f32 %v776, 0.5
      %v834 = vmul.f32 %v779, 0.5
      %v835 = vmul.f32 %v782, 0.5
      %v836 = vmul.f32 %v785, 0.5
      %v837 = vmul.f32 %v788, 0.5
      %v838 = vmul.f32 %v791, 0.5
      %v839 = vmul.f32 %v794, 0.5
      %v840 = vmul.f32 %v797, 0.5
      %v841 = vmul.f32 %v800, 0.5
      %v842 = vmul.f32 %v803, 0.5
      %v843 = vmul.f32 %v806, 0.5
      %v844 = vmul.f32 %v809, 0.5
      %v845 = vmul.f32 %v812, 0.5
      %v846 = vmul.f32 %v830, 1.442695
      %v847 = vpow.pop %v846
      %v848 = vmul.f32 %v831, 1.442695
      %v849 = vpow.pop %v848
      %v850 = vmul.f32 %v832, 1.442695
      %v851 = vpow.pop %v850
      %v852 = vmul.f32 %v833, 1.442695
      %v853 = vpow.pop %v852
      %v854 = vmul.f32 %v834, 1.442695
      %v855 = vpow.pop %v854
      %v856 = vmul.f32 %v835, 1.442695
      %v857 = vpow.pop %v856
      %v858 = vmul.f32 %v836, 1.442695
      %v859 = vpow.pop %v858
      %v860 = vmul.f32 %v837, 1.442695
      %v861 = vpow.pop %v860
      %v862 = vmul.f32 %v838, 1.442695
      %v863 = vpow.pop %v862
      %v864 = vmul.f32 %v839, 1.442695
      %v865 = vpow.pop %v864
      %v866 = vmul.f32 %v840, 1.442695
      %v867 = vpow.pop %v866
      %v868 = vmul.f32 %v841, 1.442695
      %v869 = vpow.pop %v868
      %v870 = vmul.f32 %v842, 1.442695
      %v871 = vpow.pop %v870
      %v872 = vmul.f32 %v843, 1.442695
      %v873 = vpow.pop %v872
      %v874 = vmul.f32 %v844, 1.442695
      %v875 = vpow.pop %v874
      %v876 = vmul.f32 %v845, 1.442695
      %v877 = vpow.pop %v876
      %894 = vrot.lane.b32.xlu0 %v847, 112
      %v895 = vpop.permute.xlu0 %894
      %896 = vrot.lane.b32.xlu0 %v849, 112
      %v897 = vpop.permute.xlu0 %896
      %898 = vrot.lane.b32.xlu0 %v851, 112
      %v899 = vpop.permute.xlu0 %898
      %900 = vrot.lane.b32.xlu0 %v853, 112
      %v901 = vpop.permute.xlu0 %900
      %902 = vrot.lane.b32.xlu0 %v855, 112
      %v903 = vpop.permute.xlu0 %902
      %904 = vrot.lane.b32.xlu0 %v857, 112
      %v905 = vpop.permute.xlu0 %904
      %906 = vrot.lane.b32.xlu0 %v859, 112
      %v907 = vpop.permute.xlu0 %906
      %908 = vrot.lane.b32.xlu0 %v861, 112
      %v909 = vpop.permute.xlu0 %908
      %910 = vrot.lane.b32.xlu0 %v863, 112
      %v911 = vpop.permute.xlu0 %910
      %912 = vrot.lane.b32.xlu0 %v865, 112
      %v913 = vpop.permute.xlu0 %912
      %914 = vrot.lane.b32.xlu0 %v867, 112
      %v915 = vpop.permute.xlu0 %914
      %916 = vrot.lane.b32.xlu0 %v869, 112
      %v917 = vpop.permute.xlu0 %916
      %918 = vrot.lane.b32.xlu0 %v871, 112
      %v919 = vpop.permute.xlu0 %918
      %920 = vrot.lane.b32.xlu0 %v873, 112
      %v921 = vpop.permute.xlu0 %920
      %922 = vrot.lane.b32.xlu0 %v875, 112
      %v923 = vpop.permute.xlu0 %922
      %924 = vrot.lane.b32.xlu0 %v877, 112
      %v925 = vpop.permute.xlu0 %924
      %v942 = vmul.f32 %v814, %v895
      %v943 = vmul.f32 %v815, %v897
      %v944 = vmul.f32 %v816, %v899
      %v945 = vmul.f32 %v817, %v901
      %v946 = vmul.f32 %v818, %v903
      %v947 = vmul.f32 %v819, %v905
      %v948 = vmul.f32 %v820, %v907
      %v949 = vmul.f32 %v821, %v909
      %v950 = vmul.f32 %v822, %v911
      %v951 = vmul.f32 %v823, %v913
      %v952 = vmul.f32 %v824, %v915
      %v953 = vmul.f32 %v825, %v917
      %v954 = vmul.f32 %v826, %v919
      %v955 = vmul.f32 %v827, %v921
      %v956 = vmul.f32 %v828, %v923
      %v957 = vmul.f32 %v829, %v925
      %v958 = vadd.f32 %v767, %v942
      %v959 = vadd.f32 %v770, %v943
      %v960 = vadd.f32 %v773, %v944
      %v961 = vadd.f32 %v776, %v945
      %v962 = vadd.f32 %v779, %v946
      %v963 = vadd.f32 %v782, %v947
      %v964 = vadd.f32 %v785, %v948
      %v965 = vadd.f32 %v788, %v949
      %v966 = vadd.f32 %v791, %v950
      %v967 = vadd.f32 %v794, %v951
      %v968 = vadd.f32 %v797, %v952
      %v969 = vadd.f32 %v800, %v953
      %v970 = vadd.f32 %v803, %v954
      %v971 = vadd.f32 %v806, %v955
      %v972 = vadd.f32 %v809, %v956
      %v973 = vadd.f32 %v812, %v957
      %v974 = vld [vmem:[%s7] sm:$0xff]
      %v975 = vld [vmem:[%s7 + $0x8] sm:$0xff]
      %v976 = vld [vmem:[%s7 + $0x10] sm:$0xff]
      %v977 = vld [vmem:[%s7 + $0x18] sm:$0xff]
      %v978 = vld [vmem:[%s7 + $0x20] sm:$0xff]
      %v979 = vld [vmem:[%s7 + $0x28] sm:$0xff]
      %v980 = vld [vmem:[%s7 + $0x30] sm:$0xff]
      %v981 = vld [vmem:[%s7 + $0x38] sm:$0xff]
      %v982 = vld [vmem:[%s7 + $0x40] sm:$0xff]
      %v983 = vld [vmem:[%s7 + $0x48] sm:$0xff]
      %v984 = vld [vmem:[%s7 + $0x50] sm:$0xff]
      %v985 = vld [vmem:[%s7 + $0x58] sm:$0xff]
      %v986 = vld [vmem:[%s7 + $0x60] sm:$0xff]
      %v987 = vld [vmem:[%s7 + $0x68] sm:$0xff]
      %v988 = vld [vmem:[%s7 + $0x70] sm:$0xff]
      %v989 = vld [vmem:[%s7 + $0x78] sm:$0xff]
      %v990 = vld [vmem:[%s8] sm:$0x1]
      %v992 = vperm.slane %v990, 0
      %994 = vmatpush.msra.mxu0 %v989
      %995 = vmatpush.msra.mxu0 %v988
      %996 = vmatpush.msra.mxu0 %v987
      %997 = vmatpush.msra.mxu0 %v986
      %998 = vmatpush.msra.mxu0 %v985
      %999 = vmatpush.msra.mxu0 %v984
      %1000 = vmatpush.msra.mxu0 %v983
      %1001 = vmatpush.msra.mxu0 %v982
      %1002 = vmatpush.msra.mxu0 %v981
      %1003 = vmatpush.msra.mxu0 %v980
      %1004 = vmatpush.msra.mxu0 %v979
      %1005 = vmatpush.msra.mxu0 %v978
      %1006 = vmatpush.msra.mxu0 %v977
      %1007 = vmatpush.msra.mxu0 %v976
      %1008 = vmatpush.msra.mxu0 %v975
      %1009 = vmatpush.msra.mxu0 %v974
      %1010 = vmatmul.f32.gmra.mxu0 %v571
      %v1011 = vpop.f32.mrf.mxu0
      %v1012 = vadd.f32 %v992, %v1011
      %1013 = vmatmul.f32.gmra.mxu0 %v572
      %v1014 = vpop.f32.mrf.mxu0
      %v1015 = vadd.f32 %v992, %v1014
      %1016 = vmatmul.f32.gmra.mxu0 %v573
      %v1017 = vpop.f32.mrf.mxu0
      %v1018 = vadd.f32 %v992, %v1017
      %1019 = vmatmul.f32.gmra.mxu0 %v574
      %v1020 = vpop.f32.mrf.mxu0
      %v1021 = vadd.f32 %v992, %v1020
      %1022 = vmatmul.f32.gmra.mxu0 %v575
      %v1023 = vpop.f32.mrf.mxu0
      %v1024 = vadd.f32 %v992, %v1023
      %1025 = vmatmul.f32.gmra.mxu0 %v576
      %v1026 = vpop.f32.mrf.mxu0
      %v1027 = vadd.f32 %v992, %v1026
      %1028 = vmatmul.f32.gmra.mxu0 %v577
      %v1029 = vpop.f32.mrf.mxu0
      %v1030 = vadd.f32 %v992, %v1029
      %1031 = vmatmul.f32.gmra.mxu0 %v578
      %v1032 = vpop.f32.mrf.mxu0
      %v1033 = vadd.f32 %v992, %v1032
      %1034 = vmatmul.f32.gmra.mxu0 %v579
      %v1035 = vpop.f32.mrf.mxu0
      %v1036 = vadd.f32 %v992, %v1035
      %1037 = vmatmul.f32.gmra.mxu0 %v580
      %v1038 = vpop.f32.mrf.mxu0
      %v1039 = vadd.f32 %v992, %v1038
      %1040 = vmatmul.f32.gmra.mxu0 %v581
      %v1041 = vpop.f32.mrf.mxu0
      %v1042 = vadd.f32 %v992, %v1041
      %1043 = vmatmul.f32.gmra.mxu0 %v582
      %v1044 = vpop.f32.mrf.mxu0
      %v1045 = vadd.f32 %v992, %v1044
      %1046 = vmatmul.f32.gmra.mxu0 %v583
      %v1047 = vpop.f32.mrf.mxu0
      %v1048 = vadd.f32 %v992, %v1047
      %1049 = vmatmul.f32.gmra.mxu0 %v584
      %v1050 = vpop.f32.mrf.mxu0
      %v1051 = vadd.f32 %v992, %v1050
      %1052 = vmatmul.f32.gmra.mxu0 %v585
      %v1053 = vpop.f32.mrf.mxu0
      %v1054 = vadd.f32 %v992, %v1053
      %1055 = vmatmul.f32.gmra.mxu0 %v586
      %v1056 = vpop.f32.mrf.mxu0
      %v1057 = vadd.f32 %v992, %v1056
      %1058 = vdwg.mxu0
      %v1059 = vmax.f32 %v1012, 0.0
      %v1060 = vmax.f32 %v1015, 0.0
      %v1061 = vmax.f32 %v1018, 0.0
      %v1062 = vmax.f32 %v1021, 0.0
      %v1063 = vmax.f32 %v1024, 0.0
      %v1064 = vmax.f32 %v1027, 0.0
      %v1065 = vmax.f32 %v1030, 0.0
      %v1066 = vmax.f32 %v1033, 0.0
      %v1067 = vmax.f32 %v1036, 0.0
      %v1068 = vmax.f32 %v1039, 0.0
      %v1069 = vmax.f32 %v1042, 0.0
      %v1070 = vmax.f32 %v1045, 0.0
      %v1071 = vmax.f32 %v1048, 0.0
      %v1072 = vmax.f32 %v1051, 0.0
      %v1073 = vmax.f32 %v1054, 0.0
      %v1074 = vmax.f32 %v1057, 0.0
      %v1075 = vld [vmem:[%s9] sm:$0xff]
      %v1076 = vld [vmem:[%s9 + $0x8] sm:$0xff]
      %v1077 = vld [vmem:[%s9 + $0x10] sm:$0xff]
      %v1078 = vld [vmem:[%s9 + $0x18] sm:$0xff]
      %v1079 = vld [vmem:[%s10] sm:$0x1]
      %v1081 = vperm.slane %v1079, 0
      %vm1083 = vcmask 261120
      %v1085 = vsel %vm1083, %v1059, 0
      %v1088 = vsel %vm1083, %v1060, 0
      %v1091 = vsel %vm1083, %v1061, 0
      %v1094 = vsel %vm1083, %v1062, 0
      %v1097 = vsel %vm1083, %v1063, 0
      %v1100 = vsel %vm1083, %v1064, 0
      %v1103 = vsel %vm1083, %v1065, 0
      %v1106 = vsel %vm1083, %v1066, 0
      %v1109 = vsel %vm1083, %v1067, 0
      %v1112 = vsel %vm1083, %v1068, 0
      %v1115 = vsel %vm1083, %v1069, 0
      %v1118 = vsel %vm1083, %v1070, 0
      %v1121 = vsel %vm1083, %v1071, 0
      %v1124 = vsel %vm1083, %v1072, 0
      %v1127 = vsel %vm1083, %v1073, 0
      %v1130 = vsel %vm1083, %v1074, 0
      %1132 = vmatpush.msra.mxu0 0.0
      %1133 = vmatpush.msra.mxu0 0.0
      %1134 = vmatpush.msra.mxu0 0.0
      %1135 = vmatpush.msra.mxu0 0.0
      %1136 = vmatpush.msra.mxu0 0.0
      %1137 = vmatpush.msra.mxu0 0.0
      %1138 = vmatpush.msra.mxu0 0.0
      %1139 = vmatpush.msra.mxu0 0.0
      %1140 = vmatpush.msra.mxu0 0.0
      %1141 = vmatpush.msra.mxu0 0.0
      %1142 = vmatpush.msra.mxu0 0.0
      %1143 = vmatpush.msra.mxu0 0.0
      %1144 = vmatpush.msra.mxu0 %v1078
      %1145 = vmatpush.msra.mxu0 %v1077
      %1146 = vmatpush.msra.mxu0 %v1076
      %1147 = vmatpush.msra.mxu0 %v1075
      %1148 = vmatmul.f32.gmra.mxu0 %v1085
      %v1149 = vpop.f32.mrf.mxu0
      %v1150 = vadd.f32 %v1081, %v1149
      %1151 = vmatmul.f32.gmra.mxu0 %v1088
      %v1152 = vpop.f32.mrf.mxu0
      %v1153 = vadd.f32 %v1081, %v1152
      %1154 = vmatmul.f32.gmra.mxu0 %v1091
      %v1155 = vpop.f32.mrf.mxu0
      %v1156 = vadd.f32 %v1081, %v1155
      %1157 = vmatmul.f32.gmra.mxu0 %v1094
      %v1158 = vpop.f32.mrf.mxu0
      %v1159 = vadd.f32 %v1081, %v1158
      %1160 = vmatmul.f32.gmra.mxu0 %v1097
      %v1161 = vpop.f32.mrf.mxu0
      %v1162 = vadd.f32 %v1081, %v1161
      %1163 = vmatmul.f32.gmra.mxu0 %v1100
      %v1164 = vpop.f32.mrf.mxu0
      %v1165 = vadd.f32 %v1081, %v1164
      %1166 = vmatmul.f32.gmra.mxu0 %v1103
      %v1167 = vpop.f32.mrf.mxu0
      %v1168 = vadd.f32 %v1081, %v1167
      %1169 = vmatmul.f32.gmra.mxu0 %v1106
      %v1170 = vpop.f32.mrf.mxu0
      %v1171 = vadd.f32 %v1081, %v1170
      %1172 = vmatmul.f32.gmra.mxu0 %v1109
      %v1173 = vpop.f32.mrf.mxu0
      %v1174 = vadd.f32 %v1081, %v1173
      %1175 = vmatmul.f32.gmra.mxu0 %v1112
      %v1176 = vpop.f32.mrf.mxu0
      %v1177 = vadd.f32 %v1081, %v1176
      %1178 = vmatmul.f32.gmra.mxu0 %v1115
      %v1179 = vpop.f32.mrf.mxu0
      %v1180 = vadd.f32 %v1081, %v1179
      %1181 = vmatmul.f32.gmra.mxu0 %v1118
      %v1182 = vpop.f32.mrf.mxu0
      %v1183 = vadd.f32 %v1081, %v1182
      %1184 = vmatmul.f32.gmra.mxu0 %v1121
      %v1185 = vpop.f32.mrf.mxu0
      %v1186 = vadd.f32 %v1081, %v1185
      %1187 = vmatmul.f32.gmra.mxu0 %v1124
      %v1188 = vpop.f32.mrf.mxu0
      %v1189 = vadd.f32 %v1081, %v1188
      %1190 = vmatmul.f32.gmra.mxu0 %v1127
      %v1191 = vpop.f32.mrf.mxu0
      %v1192 = vadd.f32 %v1081, %v1191
      %1193 = vmatmul.f32.gmra.mxu0 %v1130
      %v1194 = vpop.f32.mrf.mxu0
      %v1195 = vadd.f32 %v1081, %v1194
      %1196 = vdwg.mxu0
      %v1197 = vmul.f32 %v958, %v1150
      %v1198 = vmul.f32 %v959, %v1153
      %v1199 = vmul.f32 %v960, %v1156
      %v1200 = vmul.f32 %v961, %v1159
      %v1201 = vmul.f32 %v962, %v1162
      %v1202 = vmul.f32 %v963, %v1165
      %v1203 = vmul.f32 %v964, %v1168
      %v1204 = vmul.f32 %v965, %v1171
      %v1205 = vmul.f32 %v966, %v1174
      %v1206 = vmul.f32 %v967, %v1177
      %v1207 = vmul.f32 %v968, %v1180
      %v1208 = vmul.f32 %v969, %v1183
      %v1209 = vmul.f32 %v970, %v1186
      %v1210 = vmul.f32 %v971, %v1189
      %v1211 = vmul.f32 %v972, %v1192
      %v1212 = vmul.f32 %v973, %v1195
      %vm1213 = vcmask 130048
      %v1214 = vsel %vm1213, %v1197, 0.0
      %1215 = vadd.xlane.f32.xlu0 %v1214
      %v1216 = vpop.xlane.xlu0 %1215
      %v1217 = vsel %vm1213, %v1198, 0.0
      %1218 = vadd.xlane.f32.xlu0 %v1217
      %v1219 = vpop.xlane.xlu0 %1218
      %v1220 = vsel %vm1213, %v1199, 0.0
      %1221 = vadd.xlane.f32.xlu0 %v1220
      %v1222 = vpop.xlane.xlu0 %1221
      %v1223 = vsel %vm1213, %v1200, 0.0
      %1224 = vadd.xlane.f32.xlu0 %v1223
      %v1225 = vpop.xlane.xlu0 %1224
      %v1226 = vsel %vm1213, %v1201, 0.0
      %1227 = vadd.xlane.f32.xlu0 %v1226
      %v1228 = vpop.xlane.xlu0 %1227
      %v1229 = vsel %vm1213, %v1202, 0.0
      %1230 = vadd.xlane.f32.xlu0 %v1229
      %v1231 = vpop.xlane.xlu0 %1230
      %v1232 = vsel %vm1213, %v1203, 0.0
      %1233 = vadd.xlane.f32.xlu0 %v1232
      %v1234 = vpop.xlane.xlu0 %1233
      %v1235 = vsel %vm1213, %v1204, 0.0
      %1236 = vadd.xlane.f32.xlu0 %v1235
      %v1237 = vpop.xlane.xlu0 %1236
      %v1238 = vsel %vm1213, %v1205, 0.0
      %1239 = vadd.xlane.f32.xlu0 %v1238
      %v1240 = vpop.xlane.xlu0 %1239
      %v1241 = vsel %vm1213, %v1206, 0.0
      %1242 = vadd.xlane.f32.xlu0 %v1241
      %v1243 = vpop.xlane.xlu0 %1242
      %v1244 = vsel %vm1213, %v1207, 0.0
      %1245 = vadd.xlane.f32.xlu0 %v1244
      %v1246 = vpop.xlane.xlu0 %1245
      %v1247 = vsel %vm1213, %v1208, 0.0
      %1248 = vadd.xlane.f32.xlu0 %v1247
      %v1249 = vpop.xlane.xlu0 %1248
      %v1250 = vsel %vm1213, %v1209, 0.0
      %1251 = vadd.xlane.f32.xlu0 %v1250
      %v1252 = vpop.xlane.xlu0 %1251
      %v1253 = vsel %vm1213, %v1210, 0.0
      %1254 = vadd.xlane.f32.xlu0 %v1253
      %v1255 = vpop.xlane.xlu0 %1254
      %v1256 = vsel %vm1213, %v1211, 0.0
      %1257 = vadd.xlane.f32.xlu0 %v1256
      %v1258 = vpop.xlane.xlu0 %1257
      %v1259 = vsel %vm1213, %v1212, 0.0
      %1260 = vadd.xlane.f32.xlu0 %v1259
      %v1261 = vpop.xlane.xlu0 %1260
      %vm1262 = vcmask 7168
      %1263 = vst.msk [vmem:[%s535] sm:$0xff] %vm1262, %v1216
      %1264 = vst.msk [vmem:[%s535 + $0x8] sm:$0xff] %vm1262, %v1219
      %1265 = vst.msk [vmem:[%s535 + $0x10] sm:$0xff] %vm1262, %v1222
      %1266 = vst.msk [vmem:[%s535 + $0x18] sm:$0xff] %vm1262, %v1225
      %1267 = vst.msk [vmem:[%s535 + $0x20] sm:$0xff] %vm1262, %v1228
      %1268 = vst.msk [vmem:[%s535 + $0x28] sm:$0xff] %vm1262, %v1231
      %1269 = vst.msk [vmem:[%s535 + $0x30] sm:$0xff] %vm1262, %v1234
      %1270 = vst.msk [vmem:[%s535 + $0x38] sm:$0xff] %vm1262, %v1237
      %1271 = vst.msk [vmem:[%s535 + $0x40] sm:$0xff] %vm1262, %v1240
      %1272 = vst.msk [vmem:[%s535 + $0x48] sm:$0xff] %vm1262, %v1243
      %1273 = vst.msk [vmem:[%s535 + $0x50] sm:$0xff] %vm1262, %v1246
      %1274 = vst.msk [vmem:[%s535 + $0x58] sm:$0xff] %vm1262, %v1249
      %1275 = vst.msk [vmem:[%s535 + $0x60] sm:$0xff] %vm1262, %v1252
      %1276 = vst.msk [vmem:[%s535 + $0x68] sm:$0xff] %vm1262, %v1255
      %1277 = vst.msk [vmem:[%s535 + $0x70] sm:$0xff] %vm1262, %v1258
      %1278 = vst.msk [vmem:[%s535 + $0x78] sm:$0xff] %vm1262, %v1261
      %1279 = vst.msk [vmem:[%s541] sm:$0xff] %vm1213, %v767
      %1280 = vst.msk [vmem:[%s541 + $0x8] sm:$0xff] %vm1213, %v770
      %1281 = vst.msk [vmem:[%s541 + $0x10] sm:$0xff] %vm1213, %v773
      %1282 = vst.msk [vmem:[%s541 + $0x18] sm:$0xff] %vm1213, %v776
      %1283 = vst.msk [vmem:[%s541 + $0x20] sm:$0xff] %vm1213, %v779
      %1284 = vst.msk [vmem:[%s541 + $0x28] sm:$0xff] %vm1213, %v782
      %1285 = vst.msk [vmem:[%s541 + $0x30] sm:$0xff] %vm1213, %v785
      %1286 = vst.msk [vmem:[%s541 + $0x38] sm:$0xff] %vm1213, %v788
      %1287 = vst.msk [vmem:[%s541 + $0x40] sm:$0xff] %vm1213, %v791
      %1288 = vst.msk [vmem:[%s541 + $0x48] sm:$0xff] %vm1213, %v794
      %1289 = vst.msk [vmem:[%s541 + $0x50] sm:$0xff] %vm1213, %v797
      %1290 = vst.msk [vmem:[%s541 + $0x58] sm:$0xff] %vm1213, %v800
      %1291 = vst.msk [vmem:[%s541 + $0x60] sm:$0xff] %vm1213, %v803
      %1292 = vst.msk [vmem:[%s541 + $0x68] sm:$0xff] %vm1213, %v806
      %1293 = vst.msk [vmem:[%s541 + $0x70] sm:$0xff] %vm1213, %v809
      %1294 = vst.msk [vmem:[%s541 + $0x78] sm:$0xff] %vm1213, %v812
      %1311 = vrot.lane.b32.xlu0 %v767, 112
      %v1312 = vpop.permute.xlu0 %1311
      %1313 = vrot.lane.b32.xlu0 %v770, 112
      %v1314 = vpop.permute.xlu0 %1313
      %1315 = vrot.lane.b32.xlu0 %v773, 112
      %v1316 = vpop.permute.xlu0 %1315
      %1317 = vrot.lane.b32.xlu0 %v776, 112
      %v1318 = vpop.permute.xlu0 %1317
      %1319 = vrot.lane.b32.xlu0 %v779, 112
      %v1320 = vpop.permute.xlu0 %1319
      %1321 = vrot.lane.b32.xlu0 %v782, 112
      %v1322 = vpop.permute.xlu0 %1321
      %1323 = vrot.lane.b32.xlu0 %v785, 112
      %v1324 = vpop.permute.xlu0 %1323
      %1325 = vrot.lane.b32.xlu0 %v788, 112
      %v1326 = vpop.permute.xlu0 %1325
      %1327 = vrot.lane.b32.xlu0 %v791, 112
      %v1328 = vpop.permute.xlu0 %1327
      %1329 = vrot.lane.b32.xlu0 %v794, 112
      %v1330 = vpop.permute.xlu0 %1329
      %1331 = vrot.lane.b32.xlu0 %v797, 112
      %v1332 = vpop.permute.xlu0 %1331
      %1333 = vrot.lane.b32.xlu0 %v800, 112
      %v1334 = vpop.permute.xlu0 %1333
      %1335 = vrot.lane.b32.xlu0 %v803, 112
      %v1336 = vpop.permute.xlu0 %1335
      %1337 = vrot.lane.b32.xlu0 %v806, 112
      %v1338 = vpop.permute.xlu0 %1337
      %1339 = vrot.lane.b32.xlu0 %v809, 112
      %v1340 = vpop.permute.xlu0 %1339
      %1341 = vrot.lane.b32.xlu0 %v812, 112
      %v1342 = vpop.permute.xlu0 %1341
      %1359 = vst.msk [vmem:[%s547] sm:$0xff] %vm1213, %v1312
      %1360 = vst.msk [vmem:[%s547 + $0x8] sm:$0xff] %vm1213, %v1314
      %1361 = vst.msk [vmem:[%s547 + $0x10] sm:$0xff] %vm1213, %v1316
      %1362 = vst.msk [vmem:[%s547 + $0x18] sm:$0xff] %vm1213, %v1318
      %1363 = vst.msk [vmem:[%s547 + $0x20] sm:$0xff] %vm1213, %v1320
      %1364 = vst.msk [vmem:[%s547 + $0x28] sm:$0xff] %vm1213, %v1322
      %1365 = vst.msk [vmem:[%s547 + $0x30] sm:$0xff] %vm1213, %v1324
      %1366 = vst.msk [vmem:[%s547 + $0x38] sm:$0xff] %vm1213, %v1326
      %1367 = vst.msk [vmem:[%s547 + $0x40] sm:$0xff] %vm1213, %v1328
      %1368 = vst.msk [vmem:[%s547 + $0x48] sm:$0xff] %vm1213, %v1330
      %1369 = vst.msk [vmem:[%s547 + $0x50] sm:$0xff] %vm1213, %v1332
      %1370 = vst.msk [vmem:[%s547 + $0x58] sm:$0xff] %vm1213, %v1334
      %1371 = vst.msk [vmem:[%s547 + $0x60] sm:$0xff] %vm1213, %v1336
      %1372 = vst.msk [vmem:[%s547 + $0x68] sm:$0xff] %vm1213, %v1338
      %1373 = vst.msk [vmem:[%s547 + $0x70] sm:$0xff] %vm1213, %v1340
      %1374 = vst.msk [vmem:[%s547 + $0x78] sm:$0xff] %vm1213, %v1342
      %1375 = vst.msk [vmem:[%s553] sm:$0xff] %vm1213, %v958
      %1376 = vst.msk [vmem:[%s553 + $0x8] sm:$0xff] %vm1213, %v959
      %1377 = vst.msk [vmem:[%s553 + $0x10] sm:$0xff] %vm1213, %v960
      %1378 = vst.msk [vmem:[%s553 + $0x18] sm:$0xff] %vm1213, %v961
      %1379 = vst.msk [vmem:[%s553 + $0x20] sm:$0xff] %vm1213, %v962
      %1380 = vst.msk [vmem:[%s553 + $0x28] sm:$0xff] %vm1213, %v963
      %1381 = vst.msk [vmem:[%s553 + $0x30] sm:$0xff] %vm1213, %v964
      %1382 = vst.msk [vmem:[%s553 + $0x38] sm:$0xff] %vm1213, %v965
      %1383 = vst.msk [vmem:[%s553 + $0x40] sm:$0xff] %vm1213, %v966
      %1384 = vst.msk [vmem:[%s553 + $0x48] sm:$0xff] %vm1213, %v967
      %1385 = vst.msk [vmem:[%s553 + $0x50] sm:$0xff] %vm1213, %v968
      %1386 = vst.msk [vmem:[%s553 + $0x58] sm:$0xff] %vm1213, %v969
      %1387 = vst.msk [vmem:[%s553 + $0x60] sm:$0xff] %vm1213, %v970
      %1388 = vst.msk [vmem:[%s553 + $0x68] sm:$0xff] %vm1213, %v971
      %1389 = vst.msk [vmem:[%s553 + $0x70] sm:$0xff] %vm1213, %v972
      %1390 = vst.msk [vmem:[%s553 + $0x78] sm:$0xff] %vm1213, %v973
      %s1391 = smul.u32 16, %s26
      %p1392 = scmp.lt.s32.totalorder %s1391, 31
      %s1393 = scalar_select %p1392, %s1391, 31
      %s1394 = smul.addr %s1393, 8
      %s1395 = scalar_lea.vmem %s11, %s1394
      %s1396 = smul.u32 16, %s26
      %p1397 = scmp.lt.s32.totalorder %s1396, 31
      %s1398 = scalar_select %p1397, %s1396, 31
      %s1399 = smul.addr %s1398, 8
      %s1400 = scalar_lea.vmem %s12, %s1399
      %s1401 = smul.u32 16, %s26
      %p1402 = scmp.lt.s32.totalorder %s1401, 31
      %s1403 = scalar_select %p1402, %s1401, 31
      %s1404 = smul.addr %s1403, 8
      %s1405 = scalar_lea.vmem %s13, %s1404
      %s1406 = smul.u32 16, %s26
      %p1407 = scmp.lt.s32.totalorder %s1406, 31
      %s1408 = scalar_select %p1407, %s1406, 31
      %s1409 = smul.addr %s1408, 8
      %s1410 = scalar_lea.vmem %s14, %s1409
      // Predicated region
      $region65: #{tpu_custom_call.1} parent=63 // pred_check
        %p1411 = pneg %p290
      $region66: #{tpu_custom_call.1} parent=63 // pred_check_branch
        %1413 = sbr.rel (%p1411) target = $region68
      $region67: #{tpu_custom_call.1} parent=63 // pred_region
        %s1414 = smul.u32 16, %s26
      $region68: #{tpu_custom_call.1} parent=63 // pred_fallthru
        _
      // Predicated region
      $region69: #{tpu_custom_call.1} parent=63 // pred_check
        %p1415 = pneg %p316
      $region70: #{tpu_custom_call.1} parent=63 // pred_check_branch
        %1417 = sbr.rel (%p1415) target = $region72
      $region71: #{tpu_custom_call.1} parent=63 // pred_region
        %s1418 = smul.u32 16, %s26
      $region72: #{tpu_custom_call.1} parent=63 // pred_fallthru
        _
      // Predicated region
      $region73: #{tpu_custom_call.1} parent=63 // pred_check
        %p1419 = pneg %p342
      $region74: #{tpu_custom_call.1} parent=63 // pred_check_branch
        %1421 = sbr.rel (%p1419) target = $region76
      $region75: #{tpu_custom_call.1} parent=63 // pred_region
        %s1422 = smul.u32 16, %s26
      $region76: #{tpu_custom_call.1} parent=63 // pred_fallthru
        _
      // Predicated region
      $region77: #{tpu_custom_call.1} parent=63 // pred_check
        %p1423 = pneg %p368
      $region78: #{tpu_custom_call.1} parent=63 // pred_check_branch
        %1425 = sbr.rel (%p1423) target = $region80
      $region79: #{tpu_custom_call.1} parent=63 // pred_region
        %s1426 = smul.u32 16, %s26
      $region80: #{tpu_custom_call.1} parent=63 // pred_fallthru
        _
    $region64: #{tpu_custom_call.1} parent=5 // pred_fallthru
      _
    %p1427 = scmp.le.s32.totalorder 2, %s21
    // Predicated region
    $region81: #{tpu_custom_call.1} parent=5 // pred_check
      %p1428 = pneg %p1427
    $region82: #{tpu_custom_call.1} parent=5 // pred_check_branch
      %1430 = sbr.rel (%p1428) target = $region84
    $region83: #{tpu_custom_call.1} parent=5 // pred_region
      %s1431 = ssub.s32 %s21, 2
      // Predicated region
      $region85: #{tpu_custom_call.1} parent=83 // pred_check
        %p1432 = pneg %p296
      $region86: #{tpu_custom_call.1} parent=83 // pred_check_branch
        %1434 = sbr.rel (%p1432) target = $region88
      $region87: #{tpu_custom_call.1} parent=83 // pred_region
        %s1435 = smul.u32 16, %s27
        %p1436 = scmp.lt.s32.totalorder %s1435, 31
        %s1437 = scalar_select %p1436, %s1435, 31
        %s1438 = smul.addr %s1437, 8
        %s1439 = scalar_lea.vmem %s11, %s1438
      $region88: #{tpu_custom_call.1} parent=83 // pred_fallthru
        _
      // Predicated region
      $region89: #{tpu_custom_call.1} parent=83 // pred_check
        %p1440 = pneg %p322
      $region90: #{tpu_custom_call.1} parent=83 // pred_check_branch
        %1442 = sbr.rel (%p1440) target = $region92
      $region91: #{tpu_custom_call.1} parent=83 // pred_region
        %s1443 = smul.u32 16, %s27
        %p1444 = scmp.lt.s32.totalorder %s1443, 31
        %s1445 = scalar_select %p1444, %s1443, 31
        %s1446 = smul.addr %s1445, 8
        %s1447 = scalar_lea.vmem %s12, %s1446
      $region92: #{tpu_custom_call.1} parent=83 // pred_fallthru
        _
      // Predicated region
      $region93: #{tpu_custom_call.1} parent=83 // pred_check
        %p1448 = pneg %p348
      $region94: #{tpu_custom_call.1} parent=83 // pred_check_branch
        %1450 = sbr.rel (%p1448) target = $region96
      $region95: #{tpu_custom_call.1} parent=83 // pred_region
        %s1451 = smul.u32 16, %s27
        %p1452 = scmp.lt.s32.totalorder %s1451, 31
        %s1453 = scalar_select %p1452, %s1451, 31
        %s1454 = smul.addr %s1453, 8
        %s1455 = scalar_lea.vmem %s13, %s1454
      $region96: #{tpu_custom_call.1} parent=83 // pred_fallthru
        _
      // Predicated region
      $region97: #{tpu_custom_call.1} parent=83 // pred_check
        %p1456 = pneg %p374
      $region98: #{tpu_custom_call.1} parent=83 // pred_check_branch
        %1458 = sbr.rel (%p1456) target = $region100
      $region99: #{tpu_custom_call.1} parent=83 // pred_region
        %s1459 = smul.u32 16, %s27
        %p1460 = scmp.lt.s32.totalorder %s1459, 31
        %s1461 = scalar_select %p1460, %s1459, 31
        %s1462 = smul.addr %s1461, 8
        %s1463 = scalar_lea.vmem %s14, %s1462
      $region100: #{tpu_custom_call.1} parent=83 // pred_fallthru
        _
    $region84: #{tpu_custom_call.1} parent=5 // pred_fallthru
      _
  $region6: #{tpu_custom_call.1} parent=0 // loop_footer
    %s25 = sadd.s32 1, %s21
  $region7: #{tpu_custom_call.1} parent=0 // loop_footer_branch
    %20 = sbr.rel target = $region3
  $region8: #{tpu_custom_call.1} parent=0 // loop_exit
    _

</llo_original>
